<compile_context>
chip_gen: v5e
topology: v5e:2x2
jax: 0.10.0
libtpu: 0.0.40
codegen_flags: <defaults>
</compile_context>

<pallas_src>
import jax
import jax.numpy as jnp
from jax import lax
from jax.experimental import pallas as pl
from jax.experimental.pallas import tpu as pltpu


def _round_up(x, m):
    return ((x + m - 1) // m) * m


# -----------------------------------------------------------------------------
# Fused kernel: gather + mean-pool (as count-matmul) + fc1 + ReLU + fc2.
# -----------------------------------------------------------------------------
def _fasttext_kernel(idw_ref, idb_ref, idt_ref,          # (TB, S) int32 token ids
                     wtab_ref, btab_ref, ttab_ref,       # (V, E) f32 embedding tables
                     w1w_ref, w1b_ref, w1t_ref,          # (E, Hp) f32 fc1 slabs
                     b1_ref, w2_ref, b2_ref,             # (1, Hp), (Hp, Cp), (1, Cp)
                     out_ref):                           # (TB, Cp) f32
    tb, seq = idw_ref.shape
    inv_s = 1.0 / seq

    def pooled(id_ref, tab_ref):
        # Fused gather + mean pool: build per-row token counts and contract with the
        # table on the MXU.  counts @ table == mean_s(table[ids[:, s]]) * 1.0
        vocab = tab_ref.shape[0]
        ids = id_ref[...]                                             # (TB, S)
        onehot = (ids[:, :, None] ==
                  lax.broadcasted_iota(jnp.int32, (tb, seq, vocab), 2)
                  ).astype(jnp.float32)                               # (TB, S, V)
        counts = jnp.sum(onehot, axis=1) * inv_s                      # (TB, V)
        return jnp.dot(counts, tab_ref[...],
                       preferred_element_type=jnp.float32)            # (TB, E)

    # fc1 split into three (E, Hp) slabs -> no lane-concat of the pooled streams.
    h = (jnp.dot(pooled(idw_ref, wtab_ref), w1w_ref[...], preferred_element_type=jnp.float32)
         + jnp.dot(pooled(idb_ref, btab_ref), w1b_ref[...], preferred_element_type=jnp.float32)
         + jnp.dot(pooled(idt_ref, ttab_ref), w1t_ref[...], preferred_element_type=jnp.float32)
         + b1_ref[...])
    h = jnp.maximum(h, 0.0)                               # ReLU (dropout = identity, eval)
    out = jnp.dot(h, w2_ref[...], preferred_element_type=jnp.float32) + b2_ref[...]
    out_ref[...] = out.astype(out_ref.dtype)


# -----------------------------------------------------------------------------
# One-time parameter prep (hoisted out of the forward path).
# -----------------------------------------------------------------------------
def prepare_params(params):
    E = params["emb_word"].shape[1]
    H = params["w1"].shape[1]
    C = params["w2"].shape[1]
    Hp = _round_up(H, 128)
    Cp = _round_up(C, 128)
    w1 = jnp.pad(params["w1"], ((0, 0), (0, Hp - H)))
    b1 = jnp.pad(params["b1"], ((0, 0), (0, Hp - H)))
    w2 = jnp.pad(params["w2"], ((0, Hp - H), (0, Cp - C)))
    b2 = jnp.pad(params["b2"], ((0, 0), (0, Cp - C)))
    return dict(
        emb_word=params["emb_word"],
        emb_bigram=params["emb_bigram"],
        emb_trigram=params["emb_trigram"],
        w1w=w1[:E], w1b=w1[E:2 * E], w1t=w1[2 * E:],
        b1=b1, w2=w2, b2=b2,
        num_classes=C,
    )


# -----------------------------------------------------------------------------
# Forward wrapper.
# -----------------------------------------------------------------------------
def fasttext_forward(x_tuple, prep, *, tb=8):
    """x_tuple mirrors the PyTorch forward signature: (word_ids, seq_len, bigram_ids, trigram_ids)."""
    ids_word, _, ids_bigram, ids_trigram = x_tuple
    ids_word = ids_word.astype(jnp.int32)
    ids_bigram = ids_bigram.astype(jnp.int32)
    ids_trigram = ids_trigram.astype(jnp.int32)

    B, S = ids_word.shape
    E = prep["emb_word"].shape[1]
    Hp = prep["w1w"].shape[1]
    Cp = prep["w2"].shape[1]
    C = prep["num_classes"]

    # Pad batch up to a multiple of the tile; padded rows are computed and discarded.
    Bp = _round_up(B, tb)
    if Bp != B:
        pad = ((0, Bp - B), (0, 0))
        ids_word = jnp.pad(ids_word, pad)
        ids_bigram = jnp.pad(ids_bigram, pad)
        ids_trigram = jnp.pad(ids_trigram, pad)

    id_spec = pl.BlockSpec((tb, S), lambda i: (i, 0))

    def const_spec(shape):
        # Whole-array block, re-used across all batch tiles (fetched once).
        return pl.BlockSpec(shape, lambda i: (0, 0))

    out_padded = pl.pallas_call(
        _fasttext_kernel,
        out_shape=jax.ShapeDtypeStruct((Bp, Cp), jnp.float32),
        grid=(Bp // tb,),
        in_specs=[
            id_spec, id_spec, id_spec,
            const_spec(prep["emb_word"].shape),
            const_spec(prep["emb_bigram"].shape),
            const_spec(prep["emb_trigram"].shape),
            const_spec((E, Hp)), const_spec((E, Hp)), const_spec((E, Hp)),
            const_spec((1, Hp)), const_spec((Hp, Cp)), const_spec((1, Cp)),
        ],
        out_specs=pl.BlockSpec((tb, Cp), lambda i: (i, 0)),
        compiler_params=pltpu.CompilerParams(
            dimension_semantics=("parallel",),          # independent batch tiles
            vmem_limit_bytes=32 * 1024 * 1024),          # explicit budget (v7x: 64 MiB phys)
    )(ids_word, ids_bigram, ids_trigram,
      prep["emb_word"], prep["emb_bigram"], prep["emb_trigram"],
      prep["w1w"], prep["w1b"], prep["w1t"], prep["b1"], prep["w2"], prep["b2"])

    return out_padded[:B, :C]


# -----------------------------------------------------------------------------
# Parameter init (mirrors nn.Embedding / nn.Linear defaults).
# -----------------------------------------------------------------------------
def init_params(key, n_vocab, n_gram_vocab, embed, hidden_size, num_classes):
    ks = jax.random.split(key, 7)
    emb_word = jax.random.normal(ks[0], (n_vocab, embed), jnp.float32) * 0.1
    # padding_idx = n_vocab - 1 -> zero row, matching nn.Embedding(padding_idx=...)
    emb_word = emb_word.at[n_vocab - 1].set(0.0)
    emb_bigram = jax.random.normal(ks[1], (n_gram_vocab, embed), jnp.float32) * 0.1
    emb_trigram = jax.random.normal(ks[2], (n_gram_vocab, embed), jnp.float32) * 0.1

    fan1 = embed * 3
    w1 = jax.random.uniform(ks[3], (fan1, hidden_size), jnp.float32,
                            -1.0 / jnp.sqrt(fan1), 1.0 / jnp.sqrt(fan1))
    b1 = jax.random.uniform(ks[4], (1, hidden_size), jnp.float32,
                            -1.0 / jnp.sqrt(fan1), 1.0 / jnp.sqrt(fan1))
    w2 = jax.random.uniform(ks[5], (hidden_size, num_classes), jnp.float32,
                            -1.0 / jnp.sqrt(hidden_size), 1.0 / jnp.sqrt(hidden_size))
    b2 = jax.random.uniform(ks[6], (1, num_classes), jnp.float32,
                            -1.0 / jnp.sqrt(hidden_size), 1.0 / jnp.sqrt(hidden_size))
    return dict(emb_word=emb_word, emb_bigram=emb_bigram, emb_trigram=emb_trigram,
                w1=w1, b1=b1, w2=w2, b2=b2)


if __name__ == "__main__":
    # Small config consistent with the module's __init__.
    n_vocab, n_gram_vocab = 50, 64
    embed, hidden_size, num_classes = 32, 64, 8
    B, S = 16, 16                       # B=16 -> 2 parallel batch tiles (TB=8)

    key = jax.random.PRNGKey(0)
    k_params, k_w, k_b, k_t = jax.random.split(key, 4)
    params = init_params(k_params, n_vocab, n_gram_vocab, embed, hidden_size, num_classes)
    prep = prepare_params(params)       # one-time weight padding / fc1 split

    ids_word = jax.random.randint(k_w, (B, S), 0, n_vocab, jnp.int32)
    seq_len = jnp.full((B,), S, jnp.int32)  # x[1], unused by forward (matches PyTorch)
    ids_bigram = jax.random.randint(k_b, (B, S), 0, n_gram_vocab, jnp.int32)
    ids_trigram = jax.random.randint(k_t, (B, S), 0, n_gram_vocab, jnp.int32)

    out = fasttext_forward((ids_word, seq_len, ids_bigram, ids_trigram), prep)
    out = jax.block_until_ready(out)
    assert out.shape == (B, num_classes) and out.dtype == jnp.float32

    # Pure-JAX reference check of the full forward pass.
    emb = jnp.concatenate([
        jnp.take(params["emb_word"], ids_word, axis=0),
        jnp.take(params["emb_bigram"], ids_bigram, axis=0),
        jnp.take(params["emb_trigram"], ids_trigram, axis=0)], axis=-1)
    ref = jnp.maximum(emb.mean(axis=1) @ params["w1"] + params["b1"], 0.0) @ params["w2"] + params["b2"]
    assert jnp.allclose(out, ref, atol=1e-4, rtol=1e-4), float(jnp.max(jnp.abs(out - ref)))

    print("KERNEL_OK")
</pallas_src>

<mosaic_0001>
module attributes {stable_mosaic.version = 11 : i64} {
  func.func @_fasttext_kernel(%arg0: i32, %arg1: memref<8x16xi32, #tpu.memory_space<vmem>>, %arg2: memref<8x16xi32, #tpu.memory_space<vmem>>, %arg3: memref<8x16xi32, #tpu.memory_space<vmem>>, %arg4: memref<50x32xf32, #tpu.memory_space<vmem>>, %arg5: memref<64x32xf32, #tpu.memory_space<vmem>>, %arg6: memref<64x32xf32, #tpu.memory_space<vmem>>, %arg7: memref<32x128xf32, #tpu.memory_space<vmem>>, %arg8: memref<32x128xf32, #tpu.memory_space<vmem>>, %arg9: memref<32x128xf32, #tpu.memory_space<vmem>>, %arg10: memref<1x128xf32, #tpu.memory_space<vmem>>, %arg11: memref<128x128xf32, #tpu.memory_space<vmem>>, %arg12: memref<1x128xf32, #tpu.memory_space<vmem>>, %arg13: memref<8x128xf32, #tpu.memory_space<vmem>>) attributes {dimension_semantics = [#tpu.dimension_semantics<parallel>], iteration_bounds = array<i64: 2>, scalar_prefetch = 0 : i64, scratch_operands = 0 : i64, tpu.core_type = #tpu.core_type<tc>, window_params = [{transform_indices = @transform_0, window_bounds = array<i64: 8, 16>}, {transform_indices = @transform_1, window_bounds = array<i64: 8, 16>}, {transform_indices = @transform_2, window_bounds = array<i64: 8, 16>}, {pipeline_mode = #tpu.pipeline_mode<synchronous>, transform_indices = @transform_3, window_bounds = array<i64: 50, 32>}, {pipeline_mode = #tpu.pipeline_mode<synchronous>, transform_indices = @transform_4, window_bounds = array<i64: 64, 32>}, {pipeline_mode = #tpu.pipeline_mode<synchronous>, transform_indices = @transform_5, window_bounds = array<i64: 64, 32>}, {pipeline_mode = #tpu.pipeline_mode<synchronous>, transform_indices = @transform_6, window_bounds = array<i64: 32, 128>}, {pipeline_mode = #tpu.pipeline_mode<synchronous>, transform_indices = @transform_7, window_bounds = array<i64: 32, 128>}, {pipeline_mode = #tpu.pipeline_mode<synchronous>, transform_indices = @transform_8, window_bounds = array<i64: 32, 128>}, {pipeline_mode = #tpu.pipeline_mode<synchronous>, transform_indices = @transform_9, window_bounds = array<i64: 1, 128>}, {pipeline_mode = #tpu.pipeline_mode<synchronous>, transform_indices = @transform_10, window_bounds = array<i64: 128, 128>}, {pipeline_mode = #tpu.pipeline_mode<synchronous>, transform_indices = @transform_11, window_bounds = array<i64: 1, 128>}, {transform_indices = @transform_12, window_bounds = array<i64: 8, 128>}]} {
    %c0 = arith.constant 0 : index
    %c0_0 = arith.constant 0 : index
    %0 = vector.load %arg1[%c0, %c0_0] : memref<8x16xi32, #tpu.memory_space<vmem>>, vector<8x16xi32>
    %1 = vector.shape_cast %0 : vector<8x16xi32> to vector<8x16x1xi32>
    %2 = tpu.iota {dimensions = array<i32: 2>} : vector<8x16x50xi32>
    %3 = vector.broadcast %1 : vector<8x16x1xi32> to vector<8x16x50xi32>
    %4 = arith.cmpi eq, %3, %2 : vector<8x16x50xi32>
    %5 = arith.extui %4 : vector<8x16x50xi1> to vector<8x16x50xi32>
    %6 = arith.sitofp %5 : vector<8x16x50xi32> to vector<8x16x50xf32>
    %cst = arith.constant dense<0.000000e+00> : vector<8x50xf32>
    %7 = vector.multi_reduction <add>, %6, %cst [1] : vector<8x16x50xf32> to vector<8x50xf32>
    %cst_1 = arith.constant 6.250000e-02 : f32
    %8 = vector.broadcast %cst_1 : f32 to vector<8x50xf32>
    %9 = arith.mulf %7, %8 : vector<8x50xf32>
    %c0_2 = arith.constant 0 : index
    %c0_3 = arith.constant 0 : index
    %10 = vector.load %arg4[%c0_2, %c0_3] : memref<50x32xf32, #tpu.memory_space<vmem>>, vector<50x32xf32>
    %cst_4 = arith.constant dense<0.000000e+00> : vector<8x32xf32>
    %11 = tpu.matmul %9, %10, %cst_4 {dimension_numbers = #tpu.dot_dimension_numbers<[1], [0], [0], [1], [0, 0, 1, 1], [], []>} : vector<8x50xf32>, vector<50x32xf32>, vector<8x32xf32> -> vector<8x32xf32>
    %c0_5 = arith.constant 0 : index
    %c0_6 = arith.constant 0 : index
    %12 = vector.load %arg7[%c0_5, %c0_6] : memref<32x128xf32, #tpu.memory_space<vmem>>, vector<32x128xf32>
    %cst_7 = arith.constant dense<0.000000e+00> : vector<8x128xf32>
    %13 = tpu.matmul %11, %12, %cst_7 {dimension_numbers = #tpu.dot_dimension_numbers<[1], [0], [0], [1], [0, 0, 1, 1], [], []>} : vector<8x32xf32>, vector<32x128xf32>, vector<8x128xf32> -> vector<8x128xf32>
    %c0_8 = arith.constant 0 : index
    %c0_9 = arith.constant 0 : index
    %14 = vector.load %arg2[%c0_8, %c0_9] : memref<8x16xi32, #tpu.memory_space<vmem>>, vector<8x16xi32>
    %15 = vector.shape_cast %14 : vector<8x16xi32> to vector<8x16x1xi32>
    %16 = tpu.iota {dimensions = array<i32: 2>} : vector<8x16x64xi32>
    %17 = vector.broadcast %15 : vector<8x16x1xi32> to vector<8x16x64xi32>
    %18 = arith.cmpi eq, %17, %16 : vector<8x16x64xi32>
    %19 = arith.extui %18 : vector<8x16x64xi1> to vector<8x16x64xi32>
    %20 = arith.sitofp %19 : vector<8x16x64xi32> to vector<8x16x64xf32>
    %cst_10 = arith.constant dense<0.000000e+00> : vector<8x64xf32>
    %21 = vector.multi_reduction <add>, %20, %cst_10 [1] : vector<8x16x64xf32> to vector<8x64xf32>
    %cst_11 = arith.constant 6.250000e-02 : f32
    %22 = vector.broadcast %cst_11 : f32 to vector<8x64xf32>
    %23 = arith.mulf %21, %22 : vector<8x64xf32>
    %c0_12 = arith.constant 0 : index
    %c0_13 = arith.constant 0 : index
    %24 = vector.load %arg5[%c0_12, %c0_13] : memref<64x32xf32, #tpu.memory_space<vmem>>, vector<64x32xf32>
    %cst_14 = arith.constant dense<0.000000e+00> : vector<8x32xf32>
    %25 = tpu.matmul %23, %24, %cst_14 {dimension_numbers = #tpu.dot_dimension_numbers<[1], [0], [0], [1], [0, 0, 1, 1], [], []>} : vector<8x64xf32>, vector<64x32xf32>, vector<8x32xf32> -> vector<8x32xf32>
    %c0_15 = arith.constant 0 : index
    %c0_16 = arith.constant 0 : index
    %26 = vector.load %arg8[%c0_15, %c0_16] : memref<32x128xf32, #tpu.memory_space<vmem>>, vector<32x128xf32>
    %cst_17 = arith.constant dense<0.000000e+00> : vector<8x128xf32>
    %27 = tpu.matmul %25, %26, %cst_17 {dimension_numbers = #tpu.dot_dimension_numbers<[1], [0], [0], [1], [0, 0, 1, 1], [], []>} : vector<8x32xf32>, vector<32x128xf32>, vector<8x128xf32> -> vector<8x128xf32>
    %28 = arith.addf %13, %27 : vector<8x128xf32>
    %c0_18 = arith.constant 0 : index
    %c0_19 = arith.constant 0 : index
    %29 = vector.load %arg3[%c0_18, %c0_19] : memref<8x16xi32, #tpu.memory_space<vmem>>, vector<8x16xi32>
    %30 = vector.shape_cast %29 : vector<8x16xi32> to vector<8x16x1xi32>
    %31 = tpu.iota {dimensions = array<i32: 2>} : vector<8x16x64xi32>
    %32 = vector.broadcast %30 : vector<8x16x1xi32> to vector<8x16x64xi32>
    %33 = arith.cmpi eq, %32, %31 : vector<8x16x64xi32>
    %34 = arith.extui %33 : vector<8x16x64xi1> to vector<8x16x64xi32>
    %35 = arith.sitofp %34 : vector<8x16x64xi32> to vector<8x16x64xf32>
    %cst_20 = arith.constant dense<0.000000e+00> : vector<8x64xf32>
    %36 = vector.multi_reduction <add>, %35, %cst_20 [1] : vector<8x16x64xf32> to vector<8x64xf32>
    %cst_21 = arith.constant 6.250000e-02 : f32
    %37 = vector.broadcast %cst_21 : f32 to vector<8x64xf32>
    %38 = arith.mulf %36, %37 : vector<8x64xf32>
    %c0_22 = arith.constant 0 : index
    %c0_23 = arith.constant 0 : index
    %39 = vector.load %arg6[%c0_22, %c0_23] : memref<64x32xf32, #tpu.memory_space<vmem>>, vector<64x32xf32>
    %cst_24 = arith.constant dense<0.000000e+00> : vector<8x32xf32>
    %40 = tpu.matmul %38, %39, %cst_24 {dimension_numbers = #tpu.dot_dimension_numbers<[1], [0], [0], [1], [0, 0, 1, 1], [], []>} : vector<8x64xf32>, vector<64x32xf32>, vector<8x32xf32> -> vector<8x32xf32>
    %c0_25 = arith.constant 0 : index
    %c0_26 = arith.constant 0 : index
    %41 = vector.load %arg9[%c0_25, %c0_26] : memref<32x128xf32, #tpu.memory_space<vmem>>, vector<32x128xf32>
    %cst_27 = arith.constant dense<0.000000e+00> : vector<8x128xf32>
    %42 = tpu.matmul %40, %41, %cst_27 {dimension_numbers = #tpu.dot_dimension_numbers<[1], [0], [0], [1], [0, 0, 1, 1], [], []>} : vector<8x32xf32>, vector<32x128xf32>, vector<8x128xf32> -> vector<8x128xf32>
    %43 = arith.addf %28, %42 : vector<8x128xf32>
    %c0_28 = arith.constant 0 : index
    %c0_29 = arith.constant 0 : index
    %44 = vector.load %arg10[%c0_28, %c0_29] : memref<1x128xf32, #tpu.memory_space<vmem>>, vector<1x128xf32>
    %45 = vector.broadcast %44 : vector<1x128xf32> to vector<8x128xf32>
    %46 = arith.addf %43, %45 : vector<8x128xf32>
    %cst_30 = arith.constant 0.000000e+00 : f32
    %47 = vector.broadcast %cst_30 : f32 to vector<8x128xf32>
    %48 = arith.maximumf %46, %47 : vector<8x128xf32>
    %c0_31 = arith.constant 0 : index
    %c0_32 = arith.constant 0 : index
    %49 = vector.load %arg11[%c0_31, %c0_32] : memref<128x128xf32, #tpu.memory_space<vmem>>, vector<128x128xf32>
    %cst_33 = arith.constant dense<0.000000e+00> : vector<8x128xf32>
    %50 = tpu.matmul %48, %49, %cst_33 {dimension_numbers = #tpu.dot_dimension_numbers<[1], [0], [0], [1], [0, 0, 1, 1], [], []>} : vector<8x128xf32>, vector<128x128xf32>, vector<8x128xf32> -> vector<8x128xf32>
    %c0_34 = arith.constant 0 : index
    %c0_35 = arith.constant 0 : index
    %51 = vector.load %arg12[%c0_34, %c0_35] : memref<1x128xf32, #tpu.memory_space<vmem>>, vector<1x128xf32>
    %52 = vector.broadcast %51 : vector<1x128xf32> to vector<8x128xf32>
    %53 = arith.addf %50, %52 : vector<8x128xf32>
    %c0_36 = arith.constant 0 : index
    %c0_37 = arith.constant 0 : index
    %54 = vector.load %arg13[%c0_36, %c0_37] : memref<8x128xf32, #tpu.memory_space<vmem>>, vector<8x128xf32>
    tpu.vector_store %arg13[%c0_36, %c0_37], %53 {strides = array<i32>} : memref<8x128xf32, #tpu.memory_space<vmem>>, vector<8x128xf32>,
    return
  }
  func.func @transform_0(%arg0: i32) -> (i32, i32) {
    %c0_i32 = arith.constant 0 : i32
    %c0_i32_0 = arith.constant 0 : i32
    return %arg0, %c0_i32 : i32, i32
  }
  func.func @transform_1(%arg0: i32) -> (i32, i32) {
    %c0_i32 = arith.constant 0 : i32
    %c0_i32_0 = arith.constant 0 : i32
    return %arg0, %c0_i32 : i32, i32
  }
  func.func @transform_2(%arg0: i32) -> (i32, i32) {
    %c0_i32 = arith.constant 0 : i32
    %c0_i32_0 = arith.constant 0 : i32
    return %arg0, %c0_i32 : i32, i32
  }
  func.func @transform_3(%arg0: i32) -> (i32, i32) {
    %c0_i32 = arith.constant 0 : i32
    %c0_i32_0 = arith.constant 0 : i32
    %c0_i32_1 = arith.constant 0 : i32
    return %c0_i32, %c0_i32_0 : i32, i32
  }
  func.func @transform_4(%arg0: i32) -> (i32, i32) {
    %c0_i32 = arith.constant 0 : i32
    %c0_i32_0 = arith.constant 0 : i32
    %c0_i32_1 = arith.constant 0 : i32
    return %c0_i32, %c0_i32_0 : i32, i32
  }
  func.func @transform_5(%arg0: i32) -> (i32, i32) {
    %c0_i32 = arith.constant 0 : i32
    %c0_i32_0 = arith.constant 0 : i32
    %c0_i32_1 = arith.constant 0 : i32
    return %c0_i32, %c0_i32_0 : i32, i32
  }
  func.func @transform_6(%arg0: i32) -> (i32, i32) {
    %c0_i32 = arith.constant 0 : i32
    %c0_i32_0 = arith.constant 0 : i32
    %c0_i32_1 = arith.constant 0 : i32
    return %c0_i32, %c0_i32_0 : i32, i32
  }
  func.func @transform_7(%arg0: i32) -> (i32, i32) {
    %c0_i32 = arith.constant 0 : i32
    %c0_i32_0 = arith.constant 0 : i32
    %c0_i32_1 = arith.constant 0 : i32
    return %c0_i32, %c0_i32_0 : i32, i32
  }
  func.func @transform_8(%arg0: i32) -> (i32, i32) {
    %c0_i32 = arith.constant 0 : i32
    %c0_i32_0 = arith.constant 0 : i32
    %c0_i32_1 = arith.constant 0 : i32
    return %c0_i32, %c0_i32_0 : i32, i32
  }
  func.func @transform_9(%arg0: i32) -> (i32, i32) {
    %c0_i32 = arith.constant 0 : i32
    %c0_i32_0 = arith.constant 0 : i32
    %c0_i32_1 = arith.constant 0 : i32
    return %c0_i32, %c0_i32_0 : i32, i32
  }
  func.func @transform_10(%arg0: i32) -> (i32, i32) {
    %c0_i32 = arith.constant 0 : i32
    %c0_i32_0 = arith.constant 0 : i32
    %c0_i32_1 = arith.constant 0 : i32
    return %c0_i32, %c0_i32_0 : i32, i32
  }
  func.func @transform_11(%arg0: i32) -> (i32, i32) {
    %c0_i32 = arith.constant 0 : i32
    %c0_i32_0 = arith.constant 0 : i32
    %c0_i32_1 = arith.constant 0 : i32
    return %c0_i32, %c0_i32_0 : i32, i32
  }
  func.func @transform_12(%arg0: i32) -> (i32, i32) {
    %c0_i32 = arith.constant 0 : i32
    %c0_i32_0 = arith.constant 0 : i32
    return %arg0, %c0_i32 : i32, i32
  }
}

</mosaic_0001>

<llo_original>
// kernel: tpu_custom_call.1
$region0: #{tpu_custom_call.1}
  #allocation0 [shape = 'u32[]', space=smem, size = 0x4, offset = 0x4, fixed_abs, tag = 'smem constant byte address 0x4 - core index']
  #allocation1 [shape = 'u32[72,128]{1,0:T(1,128)}', space=vmem, size = 0x9000, scoped, tag = 'internal scratch']
  %s0 = inlined_call_operand.vmem [shape: s32[16,16], index: 0, kind: input, shape index: {}]
  %s1 = inlined_call_operand.hbm [shape: s32[16,16], index: 1, kind: input, shape index: {}]
  %s2 = inlined_call_operand.hbm [shape: s32[16,16], index: 2, kind: input, shape index: {}]
  %s3 = inlined_call_operand.vmem [shape: f32[50,32], index: 3, kind: input, shape index: {}]
  %s4 = inlined_call_operand.vmem [shape: f32[64,32], index: 4, kind: input, shape index: {}]
  %s5 = inlined_call_operand.vmem [shape: f32[64,32], index: 5, kind: input, shape index: {}]
  %s6 = inlined_call_operand.vmem [shape: f32[32,128], index: 6, kind: input, shape index: {}]
  %s7 = inlined_call_operand.vmem [shape: f32[32,128], index: 7, kind: input, shape index: {}]
  %s8 = inlined_call_operand.hbm [shape: f32[32,128], index: 8, kind: input, shape index: {}]
  %s9 = inlined_call_operand.vmem [shape: f32[1,128], index: 9, kind: input, shape index: {}]
  %s10 = inlined_call_operand.vmem [shape: f32[128,128], index: 10, kind: input, shape index: {}]
  %s11 = inlined_call_operand.vmem [shape: f32[1,128], index: 11, kind: input, shape index: {}]
  %s12 = inlined_call_operand.hbm [shape: f32[16,128], index: 12, kind: output, shape index: {}]
  %s13 = sld [smem:[#allocation0]]
  $region93: #{tpu_custom_call.1} parent=0
    _
  %s15 = ssub.s32 1, %s13
  %s16 = scalar_select 0, %s15, %s13
  $region1: #{tpu_custom_call.1} parent=0
    #allocation2 [shape = 'u8[8192]{0}', space=vmem, size = 0x2000, scoped, tag = 'input window, operand 1']
    #allocation3 [shape = 's32[2]{0}', space=sflag, size = 0x8, scoped, tag = 'scoped memory for tpu_custom_call.1']
    #allocation4 [shape = 's32[2]{0}', space=sflag, size = 0x8, scoped, tag = 'scoped memory for tpu_custom_call.1']
    #allocation5 [shape = 'u8[8192]{0}', space=vmem, size = 0x2000, scoped, tag = 'input window, operand 2']
    #allocation6 [shape = 's32[2]{0}', space=sflag, size = 0x8, scoped, tag = 'scoped memory for tpu_custom_call.1']
    #allocation7 [shape = 'u8[16384]{0}', space=vmem, size = 0x4000, scoped, tag = 'input window, operand 8, single buffered']
    #allocation8 [shape = 'u8[8192]{0}', space=vmem, size = 0x2000, scoped, tag = 'output window, operand 0']
    %17 = vsyncpa [#allocation3], 0
    %s18 = scalar_lea.sflag [#allocation3], 1
    %19 = vsyncpa %s18, 0
    %20 = vsyncpa [#allocation6], 0
    %s21 = scalar_lea.sflag [#allocation6], 1
    %22 = vsyncpa %s21, 0
    %23 = vsyncpa [#allocation4], 0
    %s24 = scalar_lea.sflag [#allocation4], 1
    %25 = vsyncpa %s24, 0
    loop: start=0, step=1, limit=4
    $region2: #{tpu_custom_call.1} parent=1 // loop_pre_header
      _
    $region3: #{tpu_custom_call.1} parent=1 // loop_header
      %s27 = sphi 0, %s31
      %p28 = scmp.ge.s32.totalorder %s27, 4
      %s37 = sphi 0, %s39
      %s40 = sphi 0, %s37
      %s41 = sphi 0, %s40
      %s57 = sphi 0, %s41
      %s63 = sphi 0, %s65
      %s66 = sphi 0, %s63
      %s67 = sphi 0, %s66
      %s83 = sphi 0, %s67
      %s89 = sphi 0, %s91
      %s92 = sphi 0, %s89
      %s93 = sphi 0, %s92
      %s109 = sphi 0, %s93
      %s113 = sphi 0, %s113
      %s115 = sphi 0, %s113
      %s116 = sphi 0, %s115
      %s130 = sphi 0, %s116
      %s134 = sphi 0, %s134
      %s136 = sphi 0, %s134
      %s137 = sphi 0, %s136
      %s151 = sphi 0, %s137
      %s155 = sphi 0, %s155
      %s157 = sphi 0, %s155
      %s158 = sphi 0, %s157
      %s172 = sphi 0, %s158
      %s176 = sphi 0, %s176
      %s178 = sphi 0, %s176
      %s179 = sphi 0, %s178
      %s193 = sphi 0, %s179
      %s197 = sphi 0, %s197
      %s199 = sphi 0, %s197
      %s200 = sphi 0, %s199
      %s214 = sphi 0, %s200
      %s218 = sphi 0, %s218
      %s220 = sphi 0, %s218
      %s221 = sphi 0, %s220
      %s235 = sphi 0, %s221
      %s239 = sphi 0, %s239
      %s241 = sphi 0, %s239
      %s242 = sphi 0, %s241
      %s256 = sphi 0, %s242
      %s260 = sphi 0, %s260
      %s262 = sphi 0, %s260
      %s263 = sphi 0, %s262
      %s277 = sphi 0, %s263
      %s281 = sphi 0, %s281
      %s283 = sphi 0, %s281
      %s284 = sphi 0, %s283
      %s298 = sphi 0, %s284
      %s304 = sphi 0, %s306
      %s307 = sphi 0, %s304
      %s308 = sphi 0, %s307
      %s324 = sphi 0, %s308
    $region4: #{tpu_custom_call.1} parent=1 // loop_header_branch
      %30 = sbr.rel (%p28) target = $region8
    $region5: #{tpu_custom_call.1} parent=1 // loop_body
      %s32 = ssub.s32 %s27, 1
      %s33 = ssub.s32 %s27, 2
      %s34 = sadd.s32 %s27, 1
      %s35 = ssub.s32 %s27, %s34
      %p36 = scmp.eq.s32.totalorder %s35, 0
      %s38 = sadd.s32 %s37, 1
      %s39 = scalar_select %p36, %s37, %s38
      %p42 = pneg %p36
      %p43 = scmp.eq.s32.totalorder %s27, 1
      %p44 = por %p42, %p43
      %p45 = scmp.ne.s32.totalorder %s37, %s40
      %p46 = scmp.eq.s32.totalorder %s27, 0
      %p47 = por %p45, %p46
      %p48 = scmp.ne.s32.totalorder %s37, %s40
      %p49 = scmp.eq.s32.totalorder %s32, 1
      %p50 = por %p48, %p49
      %p51 = scmp.ne.s32.totalorder %s40, %s41
      %p52 = scmp.eq.s32.totalorder %s32, 0
      %p53 = por %p51, %p52
      %p54 = scmp.ne.s32.totalorder %s40, %s41
      %p55 = scmp.eq.s32.totalorder %s33, 1
      %p56 = por %p54, %p55
      %p58 = scmp.ne.s32.totalorder %s41, %s57
      %p59 = scmp.eq.s32.totalorder %s33, 0
      %p60 = por %p58, %p59
      %s61 = ssub.s32 %s27, %s34
      %p62 = scmp.eq.s32.totalorder %s61, 0
      %s64 = sadd.s32 %s63, 1
      %s65 = scalar_select %p62, %s63, %s64
      %p68 = pneg %p62
      %p69 = scmp.eq.s32.totalorder %s27, 1
      %p70 = por %p68, %p69
      %p71 = scmp.ne.s32.totalorder %s63, %s66
      %p72 = scmp.eq.s32.totalorder %s27, 0
      %p73 = por %p71, %p72
      %p74 = scmp.ne.s32.totalorder %s63, %s66
      %p75 = scmp.eq.s32.totalorder %s32, 1
      %p76 = por %p74, %p75
      %p77 = scmp.ne.s32.totalorder %s66, %s67
      %p78 = scmp.eq.s32.totalorder %s32, 0
      %p79 = por %p77, %p78
      %p80 = scmp.ne.s32.totalorder %s66, %s67
      %p81 = scmp.eq.s32.totalorder %s33, 1
      %p82 = por %p80, %p81
      %p84 = scmp.ne.s32.totalorder %s67, %s83
      %p85 = scmp.eq.s32.totalorder %s33, 0
      %p86 = por %p84, %p85
      %s87 = ssub.s32 %s27, %s34
      %p88 = scmp.eq.s32.totalorder %s87, 0
      %s90 = sadd.s32 %s89, 1
      %s91 = scalar_select %p88, %s89, %s90
      %p94 = pneg %p88
      %p95 = scmp.eq.s32.totalorder %s27, 1
      %p96 = por %p94, %p95
      %p97 = scmp.ne.s32.totalorder %s89, %s92
      %p98 = scmp.eq.s32.totalorder %s27, 0
      %p99 = por %p97, %p98
      %p100 = scmp.ne.s32.totalorder %s89, %s92
      %p101 = scmp.eq.s32.totalorder %s32, 1
      %p102 = por %p100, %p101
      %p103 = scmp.ne.s32.totalorder %s92, %s93
      %p104 = scmp.eq.s32.totalorder %s32, 0
      %p105 = por %p103, %p104
      %p106 = scmp.ne.s32.totalorder %s92, %s93
      %p107 = scmp.eq.s32.totalorder %s33, 1
      %p108 = por %p106, %p107
      %p110 = scmp.ne.s32.totalorder %s93, %s109
      %p111 = scmp.eq.s32.totalorder %s33, 0
      %p112 = por %p110, %p111
      %s114 = sadd.s32 %s113, 1
      %p117 = scmp.eq.s32.totalorder %s27, 1
      %p118 = scmp.ne.s32.totalorder %s113, %s115
      %p119 = scmp.eq.s32.totalorder %s27, 0
      %p120 = por %p118, %p119
      %p121 = scmp.ne.s32.totalorder %s113, %s115
      %p122 = scmp.eq.s32.totalorder %s32, 1
      %p123 = por %p121, %p122
      %p124 = scmp.ne.s32.totalorder %s115, %s116
      %p125 = scmp.eq.s32.totalorder %s32, 0
      %p126 = por %p124, %p125
      %p127 = scmp.ne.s32.totalorder %s115, %s116
      %p128 = scmp.eq.s32.totalorder %s33, 1
      %p129 = por %p127, %p128
      %p131 = scmp.ne.s32.totalorder %s116, %s130
      %p132 = scmp.eq.s32.totalorder %s33, 0
      %p133 = por %p131, %p132
      %s135 = sadd.s32 %s134, 1
      %p138 = scmp.eq.s32.totalorder %s27, 1
      %p139 = scmp.ne.s32.totalorder %s134, %s136
      %p140 = scmp.eq.s32.totalorder %s27, 0
      %p141 = por %p139, %p140
      %p142 = scmp.ne.s32.totalorder %s134, %s136
      %p143 = scmp.eq.s32.totalorder %s32, 1
      %p144 = por %p142, %p143
      %p145 = scmp.ne.s32.totalorder %s136, %s137
      %p146 = scmp.eq.s32.totalorder %s32, 0
      %p147 = por %p145, %p146
      %p148 = scmp.ne.s32.totalorder %s136, %s137
      %p149 = scmp.eq.s32.totalorder %s33, 1
      %p150 = por %p148, %p149
      %p152 = scmp.ne.s32.totalorder %s137, %s151
      %p153 = scmp.eq.s32.totalorder %s33, 0
      %p154 = por %p152, %p153
      %s156 = sadd.s32 %s155, 1
      %p159 = scmp.eq.s32.totalorder %s27, 1
      %p160 = scmp.ne.s32.totalorder %s155, %s157
      %p161 = scmp.eq.s32.totalorder %s27, 0
      %p162 = por %p160, %p161
      %p163 = scmp.ne.s32.totalorder %s155, %s157
      %p164 = scmp.eq.s32.totalorder %s32, 1
      %p165 = por %p163, %p164
      %p166 = scmp.ne.s32.totalorder %s157, %s158
      %p167 = scmp.eq.s32.totalorder %s32, 0
      %p168 = por %p166, %p167
      %p169 = scmp.ne.s32.totalorder %s157, %s158
      %p170 = scmp.eq.s32.totalorder %s33, 1
      %p171 = por %p169, %p170
      %p173 = scmp.ne.s32.totalorder %s158, %s172
      %p174 = scmp.eq.s32.totalorder %s33, 0
      %p175 = por %p173, %p174
      %s177 = sadd.s32 %s176, 1
      %p180 = scmp.eq.s32.totalorder %s27, 1
      %p181 = scmp.ne.s32.totalorder %s176, %s178
      %p182 = scmp.eq.s32.totalorder %s27, 0
      %p183 = por %p181, %p182
      %p184 = scmp.ne.s32.totalorder %s176, %s178
      %p185 = scmp.eq.s32.totalorder %s32, 1
      %p186 = por %p184, %p185
      %p187 = scmp.ne.s32.totalorder %s178, %s179
      %p188 = scmp.eq.s32.totalorder %s32, 0
      %p189 = por %p187, %p188
      %p190 = scmp.ne.s32.totalorder %s178, %s179
      %p191 = scmp.eq.s32.totalorder %s33, 1
      %p192 = por %p190, %p191
      %p194 = scmp.ne.s32.totalorder %s179, %s193
      %p195 = scmp.eq.s32.totalorder %s33, 0
      %p196 = por %p194, %p195
      %s198 = sadd.s32 %s197, 1
      %p201 = scmp.eq.s32.totalorder %s27, 1
      %p202 = scmp.ne.s32.totalorder %s197, %s199
      %p203 = scmp.eq.s32.totalorder %s27, 0
      %p204 = por %p202, %p203
      %p205 = scmp.ne.s32.totalorder %s197, %s199
      %p206 = scmp.eq.s32.totalorder %s32, 1
      %p207 = por %p205, %p206
      %p208 = scmp.ne.s32.totalorder %s199, %s200
      %p209 = scmp.eq.s32.totalorder %s32, 0
      %p210 = por %p208, %p209
      %p211 = scmp.ne.s32.totalorder %s199, %s200
      %p212 = scmp.eq.s32.totalorder %s33, 1
      %p213 = por %p211, %p212
      %p215 = scmp.ne.s32.totalorder %s200, %s214
      %p216 = scmp.eq.s32.totalorder %s33, 0
      %p217 = por %p215, %p216
      %s219 = sadd.s32 %s218, 1
      %p222 = scmp.eq.s32.totalorder %s27, 1
      %p223 = scmp.ne.s32.totalorder %s218, %s220
      %p224 = scmp.eq.s32.totalorder %s27, 0
      %p225 = por %p223, %p224
      %p226 = scmp.ne.s32.totalorder %s218, %s220
      %p227 = scmp.eq.s32.totalorder %s32, 1
      %p228 = por %p226, %p227
      %p229 = scmp.ne.s32.totalorder %s220, %s221
      %p230 = scmp.eq.s32.totalorder %s32, 0
      %p231 = por %p229, %p230
      %p232 = scmp.ne.s32.totalorder %s220, %s221
      %p233 = scmp.eq.s32.totalorder %s33, 1
      %p234 = por %p232, %p233
      %p236 = scmp.ne.s32.totalorder %s221, %s235
      %p237 = scmp.eq.s32.totalorder %s33, 0
      %p238 = por %p236, %p237
      %s240 = sadd.s32 %s239, 1
      %p243 = scmp.eq.s32.totalorder %s27, 1
      %p244 = scmp.ne.s32.totalorder %s239, %s241
      %p245 = scmp.eq.s32.totalorder %s27, 0
      %p246 = por %p244, %p245
      %p247 = scmp.ne.s32.totalorder %s239, %s241
      %p248 = scmp.eq.s32.totalorder %s32, 1
      %p249 = por %p247, %p248
      %p250 = scmp.ne.s32.totalorder %s241, %s242
      %p251 = scmp.eq.s32.totalorder %s32, 0
      %p252 = por %p250, %p251
      %p253 = scmp.ne.s32.totalorder %s241, %s242
      %p254 = scmp.eq.s32.totalorder %s33, 1
      %p255 = por %p253, %p254
      %p257 = scmp.ne.s32.totalorder %s242, %s256
      %p258 = scmp.eq.s32.totalorder %s33, 0
      %p259 = por %p257, %p258
      %s261 = sadd.s32 %s260, 1
      %p264 = scmp.eq.s32.totalorder %s27, 1
      %p265 = scmp.ne.s32.totalorder %s260, %s262
      %p266 = scmp.eq.s32.totalorder %s27, 0
      %p267 = por %p265, %p266
      %p268 = scmp.ne.s32.totalorder %s260, %s262
      %p269 = scmp.eq.s32.totalorder %s32, 1
      %p270 = por %p268, %p269
      %p271 = scmp.ne.s32.totalorder %s262, %s263
      %p272 = scmp.eq.s32.totalorder %s32, 0
      %p273 = por %p271, %p272
      %p274 = scmp.ne.s32.totalorder %s262, %s263
      %p275 = scmp.eq.s32.totalorder %s33, 1
      %p276 = por %p274, %p275
      %p278 = scmp.ne.s32.totalorder %s263, %s277
      %p279 = scmp.eq.s32.totalorder %s33, 0
      %p280 = por %p278, %p279
      %s282 = sadd.s32 %s281, 1
      %p285 = scmp.eq.s32.totalorder %s27, 1
      %p286 = scmp.ne.s32.totalorder %s281, %s283
      %p287 = scmp.eq.s32.totalorder %s27, 0
      %p288 = por %p286, %p287
      %p289 = scmp.ne.s32.totalorder %s281, %s283
      %p290 = scmp.eq.s32.totalorder %s32, 1
      %p291 = por %p289, %p290
      %p292 = scmp.ne.s32.totalorder %s283, %s284
      %p293 = scmp.eq.s32.totalorder %s32, 0
      %p294 = por %p292, %p293
      %p295 = scmp.ne.s32.totalorder %s283, %s284
      %p296 = scmp.eq.s32.totalorder %s33, 1
      %p297 = por %p295, %p296
      %p299 = scmp.ne.s32.totalorder %s284, %s298
      %p300 = scmp.eq.s32.totalorder %s33, 0
      %p301 = por %p299, %p300
      %s302 = ssub.s32 %s27, %s34
      %p303 = scmp.eq.s32.totalorder %s302, 0
      %s305 = sadd.s32 %s304, 1
      %s306 = scalar_select %p303, %s304, %s305
      %p309 = pneg %p303
      %p310 = scmp.eq.s32.totalorder %s27, 1
      %p311 = por %p309, %p310
      %p312 = scmp.ne.s32.totalorder %s304, %s307
      %p313 = scmp.eq.s32.totalorder %s27, 0
      %p314 = por %p312, %p313
      %p315 = scmp.ne.s32.totalorder %s304, %s307
      %p316 = scmp.eq.s32.totalorder %s32, 1
      %p317 = por %p315, %p316
      %p318 = scmp.ne.s32.totalorder %s307, %s308
      %p319 = scmp.eq.s32.totalorder %s32, 0
      %p320 = por %p318, %p319
      %p321 = scmp.ne.s32.totalorder %s307, %s308
      %p322 = scmp.eq.s32.totalorder %s33, 1
      %p323 = por %p321, %p322
      %p325 = scmp.ne.s32.totalorder %s308, %s324
      %p326 = scmp.eq.s32.totalorder %s33, 0
      %p327 = por %p325, %p326
      %p328 = scmp.le.s32.totalorder 1, %s27
      %p329 = scmp.lt.s32.totalorder %s27, 3
      %p330 = pnand %p328, %p329
      %p331 = pneg %p330
      // Predicated region
      $region9: #{tpu_custom_call.1} parent=5 // pred_check
        _
      $region10: #{tpu_custom_call.1} parent=5 // pred_check_branch
        %333 = sbr.rel (%p330) target = $region12
      $region11: #{tpu_custom_call.1} parent=5 // pred_region
        %s334 = ssub.s32 %s27, 1
        // Predicated region
        $region13: #{tpu_custom_call.1} parent=11 // pred_check
          %p335 = pneg %p126
        $region14: #{tpu_custom_call.1} parent=11 // pred_check_branch
          %337 = sbr.rel (%p335) target = $region16
        $region15: #{tpu_custom_call.1} parent=11 // pred_region
          _
        $region16: #{tpu_custom_call.1} parent=11 // pred_fallthru
          _
        // Predicated region
        $region17: #{tpu_custom_call.1} parent=11 // pred_check
          %p338 = pneg %p147
        $region18: #{tpu_custom_call.1} parent=11 // pred_check_branch
          %340 = sbr.rel (%p338) target = $region20
        $region19: #{tpu_custom_call.1} parent=11 // pred_region
          _
        $region20: #{tpu_custom_call.1} parent=11 // pred_fallthru
          _
        // Predicated region
        $region21: #{tpu_custom_call.1} parent=11 // pred_check
          %p341 = pneg %p168
        $region22: #{tpu_custom_call.1} parent=11 // pred_check_branch
          %343 = sbr.rel (%p341) target = $region24
        $region23: #{tpu_custom_call.1} parent=11 // pred_region
          _
        $region24: #{tpu_custom_call.1} parent=11 // pred_fallthru
          _
        // Predicated region
        $region25: #{tpu_custom_call.1} parent=11 // pred_check
          %p344 = pneg %p189
        $region26: #{tpu_custom_call.1} parent=11 // pred_check_branch
          %346 = sbr.rel (%p344) target = $region28
        $region27: #{tpu_custom_call.1} parent=11 // pred_region
          _
        $region28: #{tpu_custom_call.1} parent=11 // pred_fallthru
          _
        // Predicated region
        $region29: #{tpu_custom_call.1} parent=11 // pred_check
          %p347 = pneg %p210
        $region30: #{tpu_custom_call.1} parent=11 // pred_check_branch
          %349 = sbr.rel (%p347) target = $region32
        $region31: #{tpu_custom_call.1} parent=11 // pred_region
          _
        $region32: #{tpu_custom_call.1} parent=11 // pred_fallthru
          _
        // Predicated region
        $region33: #{tpu_custom_call.1} parent=11 // pred_check
          %p350 = pneg %p231
        $region34: #{tpu_custom_call.1} parent=11 // pred_check_branch
          %352 = sbr.rel (%p350) target = $region36
        $region35: #{tpu_custom_call.1} parent=11 // pred_region
          %354 = vsyncadd [#allocation6], 0
          %s355 = sshll.u32 %s8, 4
          %s356 = int_to_ptr.hbm [resolvable:$true] %s355
          %s357 = sshll.u32 [#allocation7], 4
          %s358 = int_to_ptr.vmem [resolvable:$true] %s357
          %363 = dma.hbm_to_vmem [thread:$0]  %s356, 512, %s358, [#allocation6], 128, 128, 8
        $region36: #{tpu_custom_call.1} parent=11 // pred_fallthru
          _
        // Predicated region
        $region37: #{tpu_custom_call.1} parent=11 // pred_check
          %p364 = pneg %p252
        $region38: #{tpu_custom_call.1} parent=11 // pred_check_branch
          %366 = sbr.rel (%p364) target = $region40
        $region39: #{tpu_custom_call.1} parent=11 // pred_region
          _
        $region40: #{tpu_custom_call.1} parent=11 // pred_fallthru
          _
        // Predicated region
        $region41: #{tpu_custom_call.1} parent=11 // pred_check
          %p367 = pneg %p273
        $region42: #{tpu_custom_call.1} parent=11 // pred_check_branch
          %369 = sbr.rel (%p367) target = $region44
        $region43: #{tpu_custom_call.1} parent=11 // pred_region
          _
        $region44: #{tpu_custom_call.1} parent=11 // pred_fallthru
          _
        // Predicated region
        $region45: #{tpu_custom_call.1} parent=11 // pred_check
          %p370 = pneg %p294
        $region46: #{tpu_custom_call.1} parent=11 // pred_check_branch
          %372 = sbr.rel (%p370) target = $region48
        $region47: #{tpu_custom_call.1} parent=11 // pred_region
          _
        $region48: #{tpu_custom_call.1} parent=11 // pred_fallthru
          _
      $region12: #{tpu_custom_call.1} parent=5 // pred_fallthru
        _
      %p373 = scmp.lt.s32.totalorder %s27, 2
      // Predicated region
      $region49: #{tpu_custom_call.1} parent=5 // pred_check
        %p374 = pneg %p373
      $region50: #{tpu_custom_call.1} parent=5 // pred_check_branch
        %376 = sbr.rel (%p374) target = $region52
      $region51: #{tpu_custom_call.1} parent=5 // pred_region
        // Predicated region
        $region53: #{tpu_custom_call.1} parent=51 // pred_check
          %p377 = pneg %p47
        $region54: #{tpu_custom_call.1} parent=51 // pred_check_branch
          %379 = sbr.rel (%p377) target = $region56
        $region55: #{tpu_custom_call.1} parent=51 // pred_region
          %p380 = scmp.lt.s32.totalorder %s27, 1
          %s381 = scalar_select %p380, %s27, 1
          %s382 = smul.addr %s381, 8
          %s383 = scalar_lea.vmem %s0, %s382
        $region56: #{tpu_custom_call.1} parent=51 // pred_fallthru
          _
        // Predicated region
        $region57: #{tpu_custom_call.1} parent=51 // pred_check
          %p384 = pneg %p73
        $region58: #{tpu_custom_call.1} parent=51 // pred_check_branch
          %386 = sbr.rel (%p384) target = $region60
        $region59: #{tpu_custom_call.1} parent=51 // pred_region
          %s387 = sand.u32 %s63, 1
          %s388 = scalar_lea.sflag [#allocation3], %s387
          %s389 = sand.u32 %s63, 1
          %s390 = smul.addr %s389, 8
          %s391 = scalar_lea.vmem [#allocation2], %s390
          %393 = vsyncadd %s388, 0
          %s394 = smul.addr %s27, 8
          %s395 = scalar_lea.hbm %s1, %s394
          %s397 = sshll.u32 %s395, 4
          %s398 = int_to_ptr.hbm [resolvable:$true] %s397
          %s399 = sshll.u32 %s391, 4
          %s400 = int_to_ptr.vmem [resolvable:$true] %s399
          %402 = dma.hbm_to_vmem [thread:$0]  %s398, 128, %s400, %s388
        $region60: #{tpu_custom_call.1} parent=51 // pred_fallthru
          _
        // Predicated region
        $region61: #{tpu_custom_call.1} parent=51 // pred_check
          %p403 = pneg %p99
        $region62: #{tpu_custom_call.1} parent=51 // pred_check_branch
          %405 = sbr.rel (%p403) target = $region64
        $region63: #{tpu_custom_call.1} parent=51 // pred_region
          %s406 = sand.u32 %s27, 1
          %s407 = scalar_lea.sflag [#allocation6], %s406
          %s408 = sand.u32 %s89, 1
          %s409 = smul.addr %s408, 8
          %s410 = scalar_lea.vmem [#allocation5], %s409
          %412 = vsyncadd %s407, 0
          %s413 = smul.addr %s27, 8
          %s414 = scalar_lea.hbm %s2, %s413
          %s416 = sshll.u32 %s414, 4
          %s417 = int_to_ptr.hbm [resolvable:$true] %s416
          %s418 = sshll.u32 %s410, 4
          %s419 = int_to_ptr.vmem [resolvable:$true] %s418
          %421 = dma.hbm_to_vmem [thread:$0]  %s417, 128, %s419, %s407
        $region64: #{tpu_custom_call.1} parent=51 // pred_fallthru
          _
      $region52: #{tpu_custom_call.1} parent=5 // pred_fallthru
        _
      %p422 = scmp.le.s32.totalorder 1, %s27
      %p423 = scmp.lt.s32.totalorder %s27, 3
      %p424 = pnand %p422, %p423
      %p425 = pneg %p424
      // Predicated region
      $region65: #{tpu_custom_call.1} parent=5 // pred_check
        _
      $region66: #{tpu_custom_call.1} parent=5 // pred_check_branch
        %427 = sbr.rel (%p424) target = $region68
      $region67: #{tpu_custom_call.1} parent=5 // pred_region
        %s428 = ssub.s32 %s27, 1
        %s429 = sand.u32 %s66, 1
        %s430 = scalar_lea.sflag [#allocation3], %s429
        %s431 = sand.u32 %s66, 1
        %s432 = smul.addr %s431, 8
        %s433 = scalar_lea.vmem [#allocation2], %s432
        // Predicated region
        $region69: #{tpu_custom_call.1} parent=67 // pred_check
          %p434 = pneg %p79
        $region70: #{tpu_custom_call.1} parent=67 // pred_check_branch
          %436 = sbr.rel (%p434) target = $region72
        $region71: #{tpu_custom_call.1} parent=67 // pred_region
          %438 = dma.done %s430, 128
        $region72: #{tpu_custom_call.1} parent=67 // pred_fallthru
          _
        %s439 = sand.u32 %s32, 1
        %s440 = scalar_lea.sflag [#allocation6], %s439
        %s441 = sand.u32 %s92, 1
        %s442 = smul.addr %s441, 8
        %s443 = scalar_lea.vmem [#allocation5], %s442
        // Predicated region
        $region73: #{tpu_custom_call.1} parent=67 // pred_check
          %p444 = pneg %p105
        $region74: #{tpu_custom_call.1} parent=67 // pred_check_branch
          %446 = sbr.rel (%p444) target = $region76
        $region75: #{tpu_custom_call.1} parent=67 // pred_region
          %448 = dma.done %s440, 128
        $region76: #{tpu_custom_call.1} parent=67 // pred_fallthru
          _
        // Predicated region
        $region77: #{tpu_custom_call.1} parent=67 // pred_check
          %p449 = pneg %p231
        $region78: #{tpu_custom_call.1} parent=67 // pred_check_branch
          %451 = sbr.rel (%p449) target = $region80
        $region79: #{tpu_custom_call.1} parent=67 // pred_region
          %453 = dma.done [#allocation6], 512
        $region80: #{tpu_custom_call.1} parent=67 // pred_fallthru
          _
        %p454 = scmp.lt.s32.totalorder %s32, 1
        %s455 = scalar_select %p454, %s32, 1
        %s456 = smul.addr %s455, 8
        %s457 = scalar_lea.vmem %s0, %s456
        %p458 = pneg %p53
        %p459 = pneg %p50
        %s460 = sand.u32 %s66, 1
        %s461 = scalar_lea.sflag [#allocation3], %s460
        %s462 = sand.u32 %s66, 1
        %s463 = smul.addr %s462, 8
        %s464 = scalar_lea.vmem [#allocation2], %s463
        %p465 = pneg %p79
        %p466 = pneg %p76
        %s467 = sand.u32 %s32, 1
        %s468 = scalar_lea.sflag [#allocation6], %s467
        %s469 = sand.u32 %s92, 1
        %s470 = smul.addr %s469, 8
        %s471 = scalar_lea.vmem [#allocation5], %s470
        %p472 = pneg %p105
        %p473 = pneg %p102
        %p474 = pneg %p126
        %p475 = pneg %p123
        %p476 = pneg %p147
        %p477 = pneg %p144
        %p478 = pneg %p168
        %p479 = pneg %p165
        %p480 = pneg %p189
        %p481 = pneg %p186
        %p482 = pneg %p210
        %p483 = pneg %p207
        %p484 = pneg %p231
        %p485 = pneg %p228
        %p486 = pneg %p252
        %p487 = pneg %p249
        %p488 = pneg %p273
        %p489 = pneg %p270
        %p490 = pneg %p294
        %p491 = pneg %p291
        %p492 = pneg %p320
        %p493 = pneg %p317
        %s494 = sand.u32 %s307, 1
        %s495 = scalar_lea.sflag [#allocation4], %s494
        %s496 = sand.u32 %s307, 1
        %s497 = smul.addr %s496, 8
        %s498 = scalar_lea.vmem [#allocation8], %s497
        %p499 = scmp.lt.s32.totalorder %s32, 1
        %s500 = scalar_select %p499, %s32, 1
        %s501 = smul.addr %s500, 8
        %s502 = scalar_lea.vmem %s0, %s501
        %v503 = vld [vmem:[%s502] sm:$0xff]
        %v504 = vperm.slane %v503, 0
        %v505 = vlaneseq
        %v506 = vshrl.u32 %v505, 7
        %508 = vset.pattern.permute.xlu0 %v506
        %509 = vperm.xlu0 %508, %v504
        %v510 = vpop.permute.xlu0 %509
        %v511 = vlaneseq
        %v512 = vshrl.u32 %v511, 7
        %v513 = vadd.s32 %v512, 8
        %514 = vset.pattern.permute.xlu0 %v513
        %515 = vperm.xlu0 %514, %v504
        %v516 = vpop.permute.xlu0 %515
        %v517 = vperm.slane %v503, 1
        %v518 = vlaneseq
        %v519 = vshrl.u32 %v518, 7
        %521 = vset.pattern.permute.xlu0 %v519
        %522 = vperm.xlu0 %521, %v517
        %v523 = vpop.permute.xlu0 %522
        %v524 = vlaneseq
        %v525 = vshrl.u32 %v524, 7
        %v526 = vadd.s32 %v525, 8
        %527 = vset.pattern.permute.xlu0 %v526
        %528 = vperm.xlu0 %527, %v517
        %v529 = vpop.permute.xlu0 %528
        %v530 = vperm.slane %v503, 2
        %v531 = vlaneseq
        %v532 = vshrl.u32 %v531, 7
        %534 = vset.pattern.permute.xlu0 %v532
        %535 = vperm.xlu0 %534, %v530
        %v536 = vpop.permute.xlu0 %535
        %v537 = vlaneseq
        %v538 = vshrl.u32 %v537, 7
        %v539 = vadd.s32 %v538, 8
        %540 = vset.pattern.permute.xlu0 %v539
        %541 = vperm.xlu0 %540, %v530
        %v542 = vpop.permute.xlu0 %541
        %v543 = vperm.slane %v503, 3
        %v544 = vlaneseq
        %v545 = vshrl.u32 %v544, 7
        %547 = vset.pattern.permute.xlu0 %v545
        %548 = vperm.xlu0 %547, %v543
        %v549 = vpop.permute.xlu0 %548
        %v550 = vlaneseq
        %v551 = vshrl.u32 %v550, 7
        %v552 = vadd.s32 %v551, 8
        %553 = vset.pattern.permute.xlu0 %v552
        %554 = vperm.xlu0 %553, %v543
        %v555 = vpop.permute.xlu0 %554
        %v556 = vperm.slane %v503, 4
        %v557 = vlaneseq
        %v558 = vshrl.u32 %v557, 7
        %560 = vset.pattern.permute.xlu0 %v558
        %561 = vperm.xlu0 %560, %v556
        %v562 = vpop.permute.xlu0 %561
        %v563 = vlaneseq
        %v564 = vshrl.u32 %v563, 7
        %v565 = vadd.s32 %v564, 8
        %566 = vset.pattern.permute.xlu0 %v565
        %567 = vperm.xlu0 %566, %v556
        %v568 = vpop.permute.xlu0 %567
        %v569 = vperm.slane %v503, 5
        %v570 = vlaneseq
        %v571 = vshrl.u32 %v570, 7
        %573 = vset.pattern.permute.xlu0 %v571
        %574 = vperm.xlu0 %573, %v569
        %v575 = vpop.permute.xlu0 %574
        %v576 = vlaneseq
        %v577 = vshrl.u32 %v576, 7
        %v578 = vadd.s32 %v577, 8
        %579 = vset.pattern.permute.xlu0 %v578
        %580 = vperm.xlu0 %579, %v569
        %v581 = vpop.permute.xlu0 %580
        %v582 = vperm.slane %v503, 6
        %v583 = vlaneseq
        %v584 = vshrl.u32 %v583, 7
        %586 = vset.pattern.permute.xlu0 %v584
        %587 = vperm.xlu0 %586, %v582
        %v588 = vpop.permute.xlu0 %587
        %v589 = vlaneseq
        %v590 = vshrl.u32 %v589, 7
        %v591 = vadd.s32 %v590, 8
        %592 = vset.pattern.permute.xlu0 %v591
        %593 = vperm.xlu0 %592, %v582
        %v594 = vpop.permute.xlu0 %593
        %v595 = vperm.slane %v503, 7
        %v596 = vlaneseq
        %v597 = vshrl.u32 %v596, 7
        %599 = vset.pattern.permute.xlu0 %v597
        %600 = vperm.xlu0 %599, %v595
        %v601 = vpop.permute.xlu0 %600
        %v602 = vlaneseq
        %v603 = vshrl.u32 %v602, 7
        %v604 = vadd.s32 %v603, 8
        %605 = vset.pattern.permute.xlu0 %v604
        %606 = vperm.xlu0 %605, %v595
        %v607 = vpop.permute.xlu0 %606
        %v608 = vlaneseq
        %v609 = vand.u32 %v608, 127
        %vm610 = vcmp.eq.s32.totalorder %v510, %v609
        %vm611 = vcmp.eq.s32.totalorder %v516, %v609
        %vm612 = vcmp.eq.s32.totalorder %v523, %v609
        %vm613 = vcmp.eq.s32.totalorder %v529, %v609
        %vm614 = vcmp.eq.s32.totalorder %v536, %v609
        %vm615 = vcmp.eq.s32.totalorder %v542, %v609
        %vm616 = vcmp.eq.s32.totalorder %v549, %v609
        %vm617 = vcmp.eq.s32.totalorder %v555, %v609
        %vm618 = vcmp.eq.s32.totalorder %v562, %v609
        %vm619 = vcmp.eq.s32.totalorder %v568, %v609
        %vm620 = vcmp.eq.s32.totalorder %v575, %v609
        %vm621 = vcmp.eq.s32.totalorder %v581, %v609
        %vm622 = vcmp.eq.s32.totalorder %v588, %v609
        %vm623 = vcmp.eq.s32.totalorder %v594, %v609
        %vm624 = vcmp.eq.s32.totalorder %v601, %v609
        %vm625 = vcmp.eq.s32.totalorder %v607, %v609
        %v626 = vsel %vm610, 1, 0
        %v627 = vsel %vm611, 1, 0
        %v628 = vsel %vm612, 1, 0
        %v629 = vsel %vm613, 1, 0
        %v630 = vsel %vm614, 1, 0
        %v631 = vsel %vm615, 1, 0
        %v632 = vsel %vm616, 1, 0
        %v633 = vsel %vm617, 1, 0
        %v634 = vsel %vm618, 1, 0
        %v635 = vsel %vm619, 1, 0
        %v636 = vsel %vm620, 1, 0
        %v637 = vsel %vm621, 1, 0
        %v638 = vsel %vm622, 1, 0
        %v639 = vsel %vm623, 1, 0
        %v640 = vsel %vm624, 1, 0
        %v641 = vsel %vm625, 1, 0
        %v642 = vcvt.s32.f32 %v626
        %v643 = vcvt.s32.f32 %v627
        %v644 = vcvt.s32.f32 %v628
        %v645 = vcvt.s32.f32 %v629
        %v646 = vcvt.s32.f32 %v630
        %v647 = vcvt.s32.f32 %v631
        %v648 = vcvt.s32.f32 %v632
        %v649 = vcvt.s32.f32 %v633
        %v650 = vcvt.s32.f32 %v634
        %v651 = vcvt.s32.f32 %v635
        %v652 = vcvt.s32.f32 %v636
        %v653 = vcvt.s32.f32 %v637
        %v654 = vcvt.s32.f32 %v638
        %v655 = vcvt.s32.f32 %v639
        %v656 = vcvt.s32.f32 %v640
        %v657 = vcvt.s32.f32 %v641
        %vm658 = vcmask 408576
        %v659 = vsel %vm658, %v642, 0.0
        %v660 = vsel %vm658, %v643, 0.0
        %v661 = vadd.f32 %v659, %v660
        %v662 = vrot.slane %v661, 4
        %v663 = vadd.f32 %v661, %v662
        %v664 = vrot.slane %v663, 2
        %v665 = vadd.f32 %v663, %v664
        %v666 = vrot.slane %v665, 1
        %v667 = vadd.f32 %v665, %v666
        %v668 = vsel %vm658, %v644, 0.0
        %v669 = vsel %vm658, %v645, 0.0
        %v670 = vadd.f32 %v668, %v669
        %v671 = vrot.slane %v670, 4
        %v672 = vadd.f32 %v670, %v671
        %v673 = vrot.slane %v672, 2
        %v674 = vadd.f32 %v672, %v673
        %v675 = vrot.slane %v674, 1
        %v676 = vadd.f32 %v674, %v675
        %v677 = vsel %vm658, %v646, 0.0
        %v678 = vsel %vm658, %v647, 0.0
        %v679 = vadd.f32 %v677, %v678
        %v680 = vrot.slane %v679, 4
        %v681 = vadd.f32 %v679, %v680
        %v682 = vrot.slane %v681, 2
        %v683 = vadd.f32 %v681, %v682
        %v684 = vrot.slane %v683, 1
        %v685 = vadd.f32 %v683, %v684
        %v686 = vsel %vm658, %v648, 0.0
        %v687 = vsel %vm658, %v649, 0.0
        %v688 = vadd.f32 %v686, %v687
        %v689 = vrot.slane %v688, 4
        %v690 = vadd.f32 %v688, %v689
        %v691 = vrot.slane %v690, 2
        %v692 = vadd.f32 %v690, %v691
        %v693 = vrot.slane %v692, 1
        %v694 = vadd.f32 %v692, %v693
        %v695 = vsel %vm658, %v650, 0.0
        %v696 = vsel %vm658, %v651, 0.0
        %v697 = vadd.f32 %v695, %v696
        %v698 = vrot.slane %v697, 4
        %v699 = vadd.f32 %v697, %v698
        %v700 = vrot.slane %v699, 2
        %v701 = vadd.f32 %v699, %v700
        %v702 = vrot.slane %v701, 1
        %v703 = vadd.f32 %v701, %v702
        %v704 = vsel %vm658, %v652, 0.0
        %v705 = vsel %vm658, %v653, 0.0
        %v706 = vadd.f32 %v704, %v705
        %v707 = vrot.slane %v706, 4
        %v708 = vadd.f32 %v706, %v707
        %v709 = vrot.slane %v708, 2
        %v710 = vadd.f32 %v708, %v709
        %v711 = vrot.slane %v710, 1
        %v712 = vadd.f32 %v710, %v711
        %v713 = vsel %vm658, %v654, 0.0
        %v714 = vsel %vm658, %v655, 0.0
        %v715 = vadd.f32 %v713, %v714
        %v716 = vrot.slane %v715, 4
        %v717 = vadd.f32 %v715, %v716
        %v718 = vrot.slane %v717, 2
        %v719 = vadd.f32 %v717, %v718
        %v720 = vrot.slane %v719, 1
        %v721 = vadd.f32 %v719, %v720
        %v722 = vsel %vm658, %v656, 0.0
        %v723 = vsel %vm658, %v657, 0.0
        %v724 = vadd.f32 %v722, %v723
        %v725 = vrot.slane %v724, 4
        %v726 = vadd.f32 %v724, %v725
        %v727 = vrot.slane %v726, 2
        %v728 = vadd.f32 %v726, %v727
        %v729 = vrot.slane %v728, 1
        %v730 = vadd.f32 %v728, %v729
        %v731 = vmul.f32 %v667, 0.0625
        %v732 = vmul.f32 %v676, 0.0625
        %v733 = vmul.f32 %v685, 0.0625
        %v734 = vmul.f32 %v694, 0.0625
        %v735 = vmul.f32 %v703, 0.0625
        %v736 = vmul.f32 %v712, 0.0625
        %v737 = vmul.f32 %v721, 0.0625
        %v738 = vmul.f32 %v730, 0.0625
        %v739 = vld [vmem:[%s3] sm:$0xff]
        %v740 = vld [vmem:[%s3 + $0x8] sm:$0xff]
        %v741 = vld [vmem:[%s3 + $0x10] sm:$0xff]
        %v742 = vld [vmem:[%s3 + $0x18] sm:$0xff]
        %v743 = vld [vmem:[%s3 + $0x20] sm:$0xff]
        %v744 = vld [vmem:[%s3 + $0x28] sm:$0xff]
        %v745 = vld [vmem:[%s3 + $0x30] sm:$0x3]
        %vm754 = vcmask 1041409
        %v755 = vsel %vm754, %v732, %v731
        %vm756 = vcmask 1042434
        %v757 = vsel %vm756, %v733, %v755
        %vm758 = vcmask 1043459
        %v759 = vsel %vm758, %v734, %v757
        %vm760 = vcmask 1044484
        %v761 = vsel %vm760, %v735, %v759
        %vm762 = vcmask 1045509
        %v763 = vsel %vm762, %v736, %v761
        %vm764 = vcmask 1046534
        %v765 = vsel %vm764, %v737, %v763
        %vm766 = vcmask 1047559
        %v767 = vsel %vm766, %v738, %v765
        %v768 = vsel %vm658, %v767, 0
        %vm770 = vcmask 1041408
        %v772 = vsel %vm770, %v745, 0
        %774 = vmatpush.msra.mxu0 0.0
        %775 = vmatpush.msra.mxu0 0.0
        %776 = vmatpush.msra.mxu0 0.0
        %777 = vmatpush.msra.mxu0 0.0
        %778 = vmatpush.msra.mxu0 0.0
        %779 = vmatpush.msra.mxu0 0.0
        %780 = vmatpush.msra.mxu0 0.0
        %781 = vmatpush.msra.mxu0 0.0
        %782 = vmatpush.msra.mxu0 0.0
        %783 = vmatpush.msra.mxu0 %v772
        %784 = vmatpush.msra.mxu0 %v744
        %785 = vmatpush.msra.mxu0 %v743
        %786 = vmatpush.msra.mxu0 %v742
        %787 = vmatpush.msra.mxu0 %v741
        %788 = vmatpush.msra.mxu0 %v740
        %789 = vmatpush.msra.mxu0 %v739
        %790 = vmatmul.f32.gmra.mxu0 %v768
        %v791 = vpop.f32.mrf.mxu0
        %v792 = vadd.f32 0.0, %v791
        %793 = vdwg.mxu0
        %v794 = vld [vmem:[%s6] sm:$0xff]
        %v795 = vld [vmem:[%s6 + $0x8] sm:$0xff]
        %v796 = vld [vmem:[%s6 + $0x10] sm:$0xff]
        %v797 = vld [vmem:[%s6 + $0x18] sm:$0xff]
        %v798 = vld [vmem:[%s433] sm:$0xff]
        %v799 = vperm.slane %v798, 0
        %v800 = vlaneseq
        %v801 = vshrl.u32 %v800, 7
        %803 = vset.pattern.permute.xlu0 %v801
        %804 = vperm.xlu0 %803, %v799
        %v805 = vpop.permute.xlu0 %804
        %v806 = vlaneseq
        %v807 = vshrl.u32 %v806, 7
        %v808 = vadd.s32 %v807, 8
        %809 = vset.pattern.permute.xlu0 %v808
        %810 = vperm.xlu0 %809, %v799
        %v811 = vpop.permute.xlu0 %810
        %v812 = vperm.slane %v798, 1
        %v813 = vlaneseq
        %v814 = vshrl.u32 %v813, 7
        %816 = vset.pattern.permute.xlu0 %v814
        %817 = vperm.xlu0 %816, %v812
        %v818 = vpop.permute.xlu0 %817
        %v819 = vlaneseq
        %v820 = vshrl.u32 %v819, 7
        %v821 = vadd.s32 %v820, 8
        %822 = vset.pattern.permute.xlu0 %v821
        %823 = vperm.xlu0 %822, %v812
        %v824 = vpop.permute.xlu0 %823
        %v825 = vperm.slane %v798, 2
        %v826 = vlaneseq
        %v827 = vshrl.u32 %v826, 7
        %829 = vset.pattern.permute.xlu0 %v827
        %830 = vperm.xlu0 %829, %v825
        %v831 = vpop.permute.xlu0 %830
        %v832 = vlaneseq
        %v833 = vshrl.u32 %v832, 7
        %v834 = vadd.s32 %v833, 8
        %835 = vset.pattern.permute.xlu0 %v834
        %836 = vperm.xlu0 %835, %v825
        %v837 = vpop.permute.xlu0 %836
        %v838 = vperm.slane %v798, 3
        %v839 = vlaneseq
        %v840 = vshrl.u32 %v839, 7
        %842 = vset.pattern.permute.xlu0 %v840
        %843 = vperm.xlu0 %842, %v838
        %v844 = vpop.permute.xlu0 %843
        %v845 = vlaneseq
        %v846 = vshrl.u32 %v845, 7
        %v847 = vadd.s32 %v846, 8
        %848 = vset.pattern.permute.xlu0 %v847
        %849 = vperm.xlu0 %848, %v838
        %v850 = vpop.permute.xlu0 %849
        %v851 = vperm.slane %v798, 4
        %v852 = vlaneseq
        %v853 = vshrl.u32 %v852, 7
        %855 = vset.pattern.permute.xlu0 %v853
        %856 = vperm.xlu0 %855, %v851
        %v857 = vpop.permute.xlu0 %856
        %v858 = vlaneseq
        %v859 = vshrl.u32 %v858, 7
        %v860 = vadd.s32 %v859, 8
        %861 = vset.pattern.permute.xlu0 %v860
        %862 = vperm.xlu0 %861, %v851
        %v863 = vpop.permute.xlu0 %862
        %v864 = vperm.slane %v798, 5
        %v865 = vlaneseq
        %v866 = vshrl.u32 %v865, 7
        %868 = vset.pattern.permute.xlu0 %v866
        %869 = vperm.xlu0 %868, %v864
        %v870 = vpop.permute.xlu0 %869
        %v871 = vlaneseq
        %v872 = vshrl.u32 %v871, 7
        %v873 = vadd.s32 %v872, 8
        %874 = vset.pattern.permute.xlu0 %v873
        %875 = vperm.xlu0 %874, %v864
        %v876 = vpop.permute.xlu0 %875
        %v877 = vperm.slane %v798, 6
        %v878 = vlaneseq
        %v879 = vshrl.u32 %v878, 7
        %881 = vset.pattern.permute.xlu0 %v879
        %882 = vperm.xlu0 %881, %v877
        %v883 = vpop.permute.xlu0 %882
        %v884 = vlaneseq
        %v885 = vshrl.u32 %v884, 7
        %v886 = vadd.s32 %v885, 8
        %887 = vset.pattern.permute.xlu0 %v886
        %888 = vperm.xlu0 %887, %v877
        %v889 = vpop.permute.xlu0 %888
        %v890 = vperm.slane %v798, 7
        %v891 = vlaneseq
        %v892 = vshrl.u32 %v891, 7
        %894 = vset.pattern.permute.xlu0 %v892
        %895 = vperm.xlu0 %894, %v890
        %v896 = vpop.permute.xlu0 %895
        %v897 = vlaneseq
        %v898 = vshrl.u32 %v897, 7
        %v899 = vadd.s32 %v898, 8
        %900 = vset.pattern.permute.xlu0 %v899
        %901 = vperm.xlu0 %900, %v890
        %v902 = vpop.permute.xlu0 %901
        %vm903 = vcmp.eq.s32.totalorder %v805, %v609
        %vm904 = vcmp.eq.s32.totalorder %v811, %v609
        %vm905 = vcmp.eq.s32.totalorder %v818, %v609
        %vm906 = vcmp.eq.s32.totalorder %v824, %v609
        %vm907 = vcmp.eq.s32.totalorder %v831, %v609
        %vm908 = vcmp.eq.s32.totalorder %v837, %v609
        %vm909 = vcmp.eq.s32.totalorder %v844, %v609
        %vm910 = vcmp.eq.s32.totalorder %v850, %v609
        %vm911 = vcmp.eq.s32.totalorder %v857, %v609
        %vm912 = vcmp.eq.s32.totalorder %v863, %v609
        %vm913 = vcmp.eq.s32.totalorder %v870, %v609
        %vm914 = vcmp.eq.s32.totalorder %v876, %v609
        %vm915 = vcmp.eq.s32.totalorder %v883, %v609
        %vm916 = vcmp.eq.s32.totalorder %v889, %v609
        %vm917 = vcmp.eq.s32.totalorder %v896, %v609
        %vm918 = vcmp.eq.s32.totalorder %v902, %v609
        %v919 = vsel %vm903, 1, 0
        %v920 = vsel %vm904, 1, 0
        %v921 = vsel %vm905, 1, 0
        %v922 = vsel %vm906, 1, 0
        %v923 = vsel %vm907, 1, 0
        %v924 = vsel %vm908, 1, 0
        %v925 = vsel %vm909, 1, 0
        %v926 = vsel %vm910, 1, 0
        %v927 = vsel %vm911, 1, 0
        %v928 = vsel %vm912, 1, 0
        %v929 = vsel %vm913, 1, 0
        %v930 = vsel %vm914, 1, 0
        %v931 = vsel %vm915, 1, 0
        %v932 = vsel %vm916, 1, 0
        %v933 = vsel %vm917, 1, 0
        %v934 = vsel %vm918, 1, 0
        %v935 = vcvt.s32.f32 %v919
        %v936 = vcvt.s32.f32 %v920
        %v937 = vcvt.s32.f32 %v921
        %v938 = vcvt.s32.f32 %v922
        %v939 = vcvt.s32.f32 %v923
        %v940 = vcvt.s32.f32 %v924
        %v941 = vcvt.s32.f32 %v925
        %v942 = vcvt.s32.f32 %v926
        %v943 = vcvt.s32.f32 %v927
        %v944 = vcvt.s32.f32 %v928
        %v945 = vcvt.s32.f32 %v929
        %v946 = vcvt.s32.f32 %v930
        %v947 = vcvt.s32.f32 %v931
        %v948 = vcvt.s32.f32 %v932
        %v949 = vcvt.s32.f32 %v933
        %v950 = vcvt.s32.f32 %v934
        %vm951 = vcmask 523264
        %v952 = vsel %vm951, %v935, 0.0
        %v953 = vsel %vm951, %v936, 0.0
        %v954 = vadd.f32 %v952, %v953
        %v955 = vrot.slane %v954, 4
        %v956 = vadd.f32 %v954, %v955
        %v957 = vrot.slane %v956, 2
        %v958 = vadd.f32 %v956, %v957
        %v959 = vrot.slane %v958, 1
        %v960 = vadd.f32 %v958, %v959
        %v961 = vsel %vm951, %v937, 0.0
        %v962 = vsel %vm951, %v938, 0.0
        %v963 = vadd.f32 %v961, %v962
        %v964 = vrot.slane %v963, 4
        %v965 = vadd.f32 %v963, %v964
        %v966 = vrot.slane %v965, 2
        %v967 = vadd.f32 %v965, %v966
        %v968 = vrot.slane %v967, 1
        %v969 = vadd.f32 %v967, %v968
        %v970 = vsel %vm951, %v939, 0.0
        %v971 = vsel %vm951, %v940, 0.0
        %v972 = vadd.f32 %v970, %v971
        %v973 = vrot.slane %v972, 4
        %v974 = vadd.f32 %v972, %v973
        %v975 = vrot.slane %v974, 2
        %v976 = vadd.f32 %v974, %v975
        %v977 = vrot.slane %v976, 1
        %v978 = vadd.f32 %v976, %v977
        %v979 = vsel %vm951, %v941, 0.0
        %v980 = vsel %vm951, %v942, 0.0
        %v981 = vadd.f32 %v979, %v980
        %v982 = vrot.slane %v981, 4
        %v983 = vadd.f32 %v981, %v982
        %v984 = vrot.slane %v983, 2
        %v985 = vadd.f32 %v983, %v984
        %v986 = vrot.slane %v985, 1
        %v987 = vadd.f32 %v985, %v986
        %v988 = vsel %vm951, %v943, 0.0
        %v989 = vsel %vm951, %v944, 0.0
        %v990 = vadd.f32 %v988, %v989
        %v991 = vrot.slane %v990, 4
        %v992 = vadd.f32 %v990, %v991
        %v993 = vrot.slane %v992, 2
        %v994 = vadd.f32 %v992, %v993
        %v995 = vrot.slane %v994, 1
        %v996 = vadd.f32 %v994, %v995
        %v997 = vsel %vm951, %v945, 0.0
        %v998 = vsel %vm951, %v946, 0.0
        %v999 = vadd.f32 %v997, %v998
        %v1000 = vrot.slane %v999, 4
        %v1001 = vadd.f32 %v999, %v1000
        %v1002 = vrot.slane %v1001, 2
        %v1003 = vadd.f32 %v1001, %v1002
        %v1004 = vrot.slane %v1003, 1
        %v1005 = vadd.f32 %v1003, %v1004
        %v1006 = vsel %vm951, %v947, 0.0
        %v1007 = vsel %vm951, %v948, 0.0
        %v1008 = vadd.f32 %v1006, %v1007
        %v1009 = vrot.slane %v1008, 4
        %v1010 = vadd.f32 %v1008, %v1009
        %v1011 = vrot.slane %v1010, 2
        %v1012 = vadd.f32 %v1010, %v1011
        %v1013 = vrot.slane %v1012, 1
        %v1014 = vadd.f32 %v1012, %v1013
        %v1015 = vsel %vm951, %v949, 0.0
        %v1016 = vsel %vm951, %v950, 0.0
        %v1017 = vadd.f32 %v1015, %v1016
        %v1018 = vrot.slane %v1017, 4
        %v1019 = vadd.f32 %v1017, %v1018
        %v1020 = vrot.slane %v1019, 2
        %v1021 = vadd.f32 %v1019, %v1020
        %v1022 = vrot.slane %v1021, 1
        %v1023 = vadd.f32 %v1021, %v1022
        %v1024 = vmul.f32 %v960, 0.0625
        %v1025 = vmul.f32 %v969, 0.0625
        %v1026 = vmul.f32 %v978, 0.0625
        %v1027 = vmul.f32 %v987, 0.0625
        %v1028 = vmul.f32 %v996, 0.0625
        %v1029 = vmul.f32 %v1005, 0.0625
        %v1030 = vmul.f32 %v1014, 0.0625
        %v1031 = vmul.f32 %v1023, 0.0625
        %v1032 = vld [vmem:[%s4] sm:$0xff]
        %v1033 = vld [vmem:[%s4 + $0x8] sm:$0xff]
        %v1034 = vld [vmem:[%s4 + $0x10] sm:$0xff]
        %v1035 = vld [vmem:[%s4 + $0x18] sm:$0xff]
        %v1036 = vld [vmem:[%s4 + $0x20] sm:$0xff]
        %v1037 = vld [vmem:[%s4 + $0x28] sm:$0xff]
        %v1038 = vld [vmem:[%s4 + $0x30] sm:$0xff]
        %v1039 = vld [vmem:[%s4 + $0x38] sm:$0xff]
        %v1048 = vsel %vm754, %v1025, %v1024
        %v1049 = vsel %vm756, %v1026, %v1048
        %v1050 = vsel %vm758, %v1027, %v1049
        %v1051 = vsel %vm760, %v1028, %v1050
        %v1052 = vsel %vm762, %v1029, %v1051
        %v1053 = vsel %vm764, %v1030, %v1052
        %v1054 = vsel %vm766, %v1031, %v1053
        %v1055 = vsel %vm951, %v1054, 0
        %1057 = vmatpush.msra.mxu0 0.0
        %1058 = vmatpush.msra.mxu0 0.0
        %1059 = vmatpush.msra.mxu0 0.0
        %1060 = vmatpush.msra.mxu0 0.0
        %1061 = vmatpush.msra.mxu0 0.0
        %1062 = vmatpush.msra.mxu0 0.0
        %1063 = vmatpush.msra.mxu0 0.0
        %1064 = vmatpush.msra.mxu0 0.0
        %1065 = vmatpush.msra.mxu0 %v1039
        %1066 = vmatpush.msra.mxu0 %v1038
        %1067 = vmatpush.msra.mxu0 %v1037
        %1068 = vmatpush.msra.mxu0 %v1036
        %1069 = vmatpush.msra.mxu0 %v1035
        %1070 = vmatpush.msra.mxu0 %v1034
        %1071 = vmatpush.msra.mxu0 %v1033
        %1072 = vmatpush.msra.mxu0 %v1032
        %1073 = vmatmul.f32.gmra.mxu0 %v1055
        %v1074 = vpop.f32.mrf.mxu0
        %v1075 = vadd.f32 0.0, %v1074
        %1076 = vdwg.mxu0
        %v1077 = vld [vmem:[%s7] sm:$0xff]
        %v1078 = vld [vmem:[%s7 + $0x8] sm:$0xff]
        %v1079 = vld [vmem:[%s7 + $0x10] sm:$0xff]
        %v1080 = vld [vmem:[%s7 + $0x18] sm:$0xff]
        %vm1081 = vcmask 261120
        %v1083 = vsel %vm1081, %v1075, 0
        %1085 = vmatpush.msra.mxu0 0.0
        %1086 = vmatpush.msra.mxu0 0.0
        %1087 = vmatpush.msra.mxu0 0.0
        %1088 = vmatpush.msra.mxu0 0.0
        %1089 = vmatpush.msra.mxu0 0.0
        %1090 = vmatpush.msra.mxu0 0.0
        %1091 = vmatpush.msra.mxu0 0.0
        %1092 = vmatpush.msra.mxu0 0.0
        %1093 = vmatpush.msra.mxu0 0.0
        %1094 = vmatpush.msra.mxu0 0.0
        %1095 = vmatpush.msra.mxu0 0.0
        %1096 = vmatpush.msra.mxu0 0.0
        %1097 = vmatpush.msra.mxu0 %v1080
        %1098 = vmatpush.msra.mxu0 %v1079
        %1099 = vmatpush.msra.mxu0 %v1078
        %1100 = vmatpush.msra.mxu0 %v1077
        %1101 = vmatmul.f32.gmra.mxu0 %v1083
        %v1102 = vpop.f32.mrf.mxu0
        %v1103 = vadd.f32 0.0, %v1102
        %1104 = vdwg.mxu0
        %v1106 = vsel %vm1081, %v792, 0
        %1108 = vmatpush.msra.mxu0 0.0
        %1109 = vmatpush.msra.mxu0 0.0
        %1110 = vmatpush.msra.mxu0 0.0
        %1111 = vmatpush.msra.mxu0 0.0
        %1112 = vmatpush.msra.mxu0 0.0
        %1113 = vmatpush.msra.mxu0 0.0
        %1114 = vmatpush.msra.mxu0 0.0
        %1115 = vmatpush.msra.mxu0 0.0
        %1116 = vmatpush.msra.mxu0 0.0
        %1117 = vmatpush.msra.mxu0 0.0
        %1118 = vmatpush.msra.mxu0 0.0
        %1119 = vmatpush.msra.mxu0 0.0
        %1120 = vmatpush.msra.mxu0 %v797
        %1121 = vmatpush.msra.mxu0 %v796
        %1122 = vmatpush.msra.mxu0 %v795
        %1123 = vmatpush.msra.mxu0 %v794
        %1124 = vmatmul.f32.gmra.mxu0 %v1106
        %v1125 = vpop.f32.mrf.mxu0
        %v1126 = vadd.f32 %v1103, %v1125
        %1127 = vdwg.mxu0
        %v1128 = vld [vmem:[%s443] sm:$0xff]
        %v1129 = vperm.slane %v1128, 0
        %v1130 = vlaneseq
        %v1131 = vshrl.u32 %v1130, 7
        %1133 = vset.pattern.permute.xlu0 %v1131
        %1134 = vperm.xlu0 %1133, %v1129
        %v1135 = vpop.permute.xlu0 %1134
        %v1136 = vlaneseq
        %v1137 = vshrl.u32 %v1136, 7
        %v1138 = vadd.s32 %v1137, 8
        %1139 = vset.pattern.permute.xlu0 %v1138
        %1140 = vperm.xlu0 %1139, %v1129
        %v1141 = vpop.permute.xlu0 %1140
        %v1142 = vperm.slane %v1128, 1
        %v1143 = vlaneseq
        %v1144 = vshrl.u32 %v1143, 7
        %1146 = vset.pattern.permute.xlu0 %v1144
        %1147 = vperm.xlu0 %1146, %v1142
        %v1148 = vpop.permute.xlu0 %1147
        %v1149 = vlaneseq
        %v1150 = vshrl.u32 %v1149, 7
        %v1151 = vadd.s32 %v1150, 8
        %1152 = vset.pattern.permute.xlu0 %v1151
        %1153 = vperm.xlu0 %1152, %v1142
        %v1154 = vpop.permute.xlu0 %1153
        %v1155 = vperm.slane %v1128, 2
        %v1156 = vlaneseq
        %v1157 = vshrl.u32 %v1156, 7
        %1159 = vset.pattern.permute.xlu0 %v1157
        %1160 = vperm.xlu0 %1159, %v1155
        %v1161 = vpop.permute.xlu0 %1160
        %v1162 = vlaneseq
        %v1163 = vshrl.u32 %v1162, 7
        %v1164 = vadd.s32 %v1163, 8
        %1165 = vset.pattern.permute.xlu0 %v1164
        %1166 = vperm.xlu0 %1165, %v1155
        %v1167 = vpop.permute.xlu0 %1166
        %v1168 = vperm.slane %v1128, 3
        %v1169 = vlaneseq
        %v1170 = vshrl.u32 %v1169, 7
        %1172 = vset.pattern.permute.xlu0 %v1170
        %1173 = vperm.xlu0 %1172, %v1168
        %v1174 = vpop.permute.xlu0 %1173
        %v1175 = vlaneseq
        %v1176 = vshrl.u32 %v1175, 7
        %v1177 = vadd.s32 %v1176, 8
        %1178 = vset.pattern.permute.xlu0 %v1177
        %1179 = vperm.xlu0 %1178, %v1168
        %v1180 = vpop.permute.xlu0 %1179
        %v1181 = vperm.slane %v1128, 4
        %v1182 = vlaneseq
        %v1183 = vshrl.u32 %v1182, 7
        %1185 = vset.pattern.permute.xlu0 %v1183
        %1186 = vperm.xlu0 %1185, %v1181
        %v1187 = vpop.permute.xlu0 %1186
        %v1188 = vlaneseq
        %v1189 = vshrl.u32 %v1188, 7
        %v1190 = vadd.s32 %v1189, 8
        %1191 = vset.pattern.permute.xlu0 %v1190
        %1192 = vperm.xlu0 %1191, %v1181
        %v1193 = vpop.permute.xlu0 %1192
        %v1194 = vperm.slane %v1128, 5
        %v1195 = vlaneseq
        %v1196 = vshrl.u32 %v1195, 7
        %1198 = vset.pattern.permute.xlu0 %v1196
        %1199 = vperm.xlu0 %1198, %v1194
        %v1200 = vpop.permute.xlu0 %1199
        %v1201 = vlaneseq
        %v1202 = vshrl.u32 %v1201, 7
        %v1203 = vadd.s32 %v1202, 8
        %1204 = vset.pattern.permute.xlu0 %v1203
        %1205 = vperm.xlu0 %1204, %v1194
        %v1206 = vpop.permute.xlu0 %1205
        %v1207 = vperm.slane %v1128, 6
        %v1208 = vlaneseq
        %v1209 = vshrl.u32 %v1208, 7
        %1211 = vset.pattern.permute.xlu0 %v1209
        %1212 = vperm.xlu0 %1211, %v1207
        %v1213 = vpop.permute.xlu0 %1212
        %v1214 = vlaneseq
        %v1215 = vshrl.u32 %v1214, 7
        %v1216 = vadd.s32 %v1215, 8
        %1217 = vset.pattern.permute.xlu0 %v1216
        %1218 = vperm.xlu0 %1217, %v1207
        %v1219 = vpop.permute.xlu0 %1218
        %v1220 = vperm.slane %v1128, 7
        %v1221 = vlaneseq
        %v1222 = vshrl.u32 %v1221, 7
        %1224 = vset.pattern.permute.xlu0 %v1222
        %1225 = vperm.xlu0 %1224, %v1220
        %v1226 = vpop.permute.xlu0 %1225
        %v1227 = vlaneseq
        %v1228 = vshrl.u32 %v1227, 7
        %v1229 = vadd.s32 %v1228, 8
        %1230 = vset.pattern.permute.xlu0 %v1229
        %1231 = vperm.xlu0 %1230, %v1220
        %v1232 = vpop.permute.xlu0 %1231
        %vm1233 = vcmp.eq.s32.totalorder %v1135, %v609
        %vm1234 = vcmp.eq.s32.totalorder %v1141, %v609
        %vm1235 = vcmp.eq.s32.totalorder %v1148, %v609
        %vm1236 = vcmp.eq.s32.totalorder %v1154, %v609
        %vm1237 = vcmp.eq.s32.totalorder %v1161, %v609
        %vm1238 = vcmp.eq.s32.totalorder %v1167, %v609
        %vm1239 = vcmp.eq.s32.totalorder %v1174, %v609
        %vm1240 = vcmp.eq.s32.totalorder %v1180, %v609
        %vm1241 = vcmp.eq.s32.totalorder %v1187, %v609
        %vm1242 = vcmp.eq.s32.totalorder %v1193, %v609
        %vm1243 = vcmp.eq.s32.totalorder %v1200, %v609
        %vm1244 = vcmp.eq.s32.totalorder %v1206, %v609
        %vm1245 = vcmp.eq.s32.totalorder %v1213, %v609
        %vm1246 = vcmp.eq.s32.totalorder %v1219, %v609
        %vm1247 = vcmp.eq.s32.totalorder %v1226, %v609
        %vm1248 = vcmp.eq.s32.totalorder %v1232, %v609
        %v1249 = vsel %vm1233, 1, 0
        %v1250 = vsel %vm1234, 1, 0
        %v1251 = vsel %vm1235, 1, 0
        %v1252 = vsel %vm1236, 1, 0
        %v1253 = vsel %vm1237, 1, 0
        %v1254 = vsel %vm1238, 1, 0
        %v1255 = vsel %vm1239, 1, 0
        %v1256 = vsel %vm1240, 1, 0
        %v1257 = vsel %vm1241, 1, 0
        %v1258 = vsel %vm1242, 1, 0
        %v1259 = vsel %vm1243, 1, 0
        %v1260 = vsel %vm1244, 1, 0
        %v1261 = vsel %vm1245, 1, 0
        %v1262 = vsel %vm1246, 1, 0
        %v1263 = vsel %vm1247, 1, 0
        %v1264 = vsel %vm1248, 1, 0
        %v1265 = vcvt.s32.f32 %v1249
        %v1266 = vcvt.s32.f32 %v1250
        %v1267 = vcvt.s32.f32 %v1251
        %v1268 = vcvt.s32.f32 %v1252
        %v1269 = vcvt.s32.f32 %v1253
        %v1270 = vcvt.s32.f32 %v1254
        %v1271 = vcvt.s32.f32 %v1255
        %v1272 = vcvt.s32.f32 %v1256
        %v1273 = vcvt.s32.f32 %v1257
        %v1274 = vcvt.s32.f32 %v1258
        %v1275 = vcvt.s32.f32 %v1259
        %v1276 = vcvt.s32.f32 %v1260
        %v1277 = vcvt.s32.f32 %v1261
        %v1278 = vcvt.s32.f32 %v1262
        %v1279 = vcvt.s32.f32 %v1263
        %v1280 = vcvt.s32.f32 %v1264
        %v1281 = vsel %vm951, %v1265, 0.0
        %v1282 = vsel %vm951, %v1266, 0.0
        %v1283 = vadd.f32 %v1281, %v1282
        %v1284 = vrot.slane %v1283, 4
        %v1285 = vadd.f32 %v1283, %v1284
        %v1286 = vrot.slane %v1285, 2
        %v1287 = vadd.f32 %v1285, %v1286
        %v1288 = vrot.slane %v1287, 1
        %v1289 = vadd.f32 %v1287, %v1288
        %v1290 = vsel %vm951, %v1267, 0.0
        %v1291 = vsel %vm951, %v1268, 0.0
        %v1292 = vadd.f32 %v1290, %v1291
        %v1293 = vrot.slane %v1292, 4
        %v1294 = vadd.f32 %v1292, %v1293
        %v1295 = vrot.slane %v1294, 2
        %v1296 = vadd.f32 %v1294, %v1295
        %v1297 = vrot.slane %v1296, 1
        %v1298 = vadd.f32 %v1296, %v1297
        %v1299 = vsel %vm951, %v1269, 0.0
        %v1300 = vsel %vm951, %v1270, 0.0
        %v1301 = vadd.f32 %v1299, %v1300
        %v1302 = vrot.slane %v1301, 4
        %v1303 = vadd.f32 %v1301, %v1302
        %v1304 = vrot.slane %v1303, 2
        %v1305 = vadd.f32 %v1303, %v1304
        %v1306 = vrot.slane %v1305, 1
        %v1307 = vadd.f32 %v1305, %v1306
        %v1308 = vsel %vm951, %v1271, 0.0
        %v1309 = vsel %vm951, %v1272, 0.0
        %v1310 = vadd.f32 %v1308, %v1309
        %v1311 = vrot.slane %v1310, 4
        %v1312 = vadd.f32 %v1310, %v1311
        %v1313 = vrot.slane %v1312, 2
        %v1314 = vadd.f32 %v1312, %v1313
        %v1315 = vrot.slane %v1314, 1
        %v1316 = vadd.f32 %v1314, %v1315
        %v1317 = vsel %vm951, %v1273, 0.0
        %v1318 = vsel %vm951, %v1274, 0.0
        %v1319 = vadd.f32 %v1317, %v1318
        %v1320 = vrot.slane %v1319, 4
        %v1321 = vadd.f32 %v1319, %v1320
        %v1322 = vrot.slane %v1321, 2
        %v1323 = vadd.f32 %v1321, %v1322
        %v1324 = vrot.slane %v1323, 1
        %v1325 = vadd.f32 %v1323, %v1324
        %v1326 = vsel %vm951, %v1275, 0.0
        %v1327 = vsel %vm951, %v1276, 0.0
        %v1328 = vadd.f32 %v1326, %v1327
        %v1329 = vrot.slane %v1328, 4
        %v1330 = vadd.f32 %v1328, %v1329
        %v1331 = vrot.slane %v1330, 2
        %v1332 = vadd.f32 %v1330, %v1331
        %v1333 = vrot.slane %v1332, 1
        %v1334 = vadd.f32 %v1332, %v1333
        %v1335 = vsel %vm951, %v1277, 0.0
        %v1336 = vsel %vm951, %v1278, 0.0
        %v1337 = vadd.f32 %v1335, %v1336
        %v1338 = vrot.slane %v1337, 4
        %v1339 = vadd.f32 %v1337, %v1338
        %v1340 = vrot.slane %v1339, 2
        %v1341 = vadd.f32 %v1339, %v1340
        %v1342 = vrot.slane %v1341, 1
        %v1343 = vadd.f32 %v1341, %v1342
        %v1344 = vsel %vm951, %v1279, 0.0
        %v1345 = vsel %vm951, %v1280, 0.0
        %v1346 = vadd.f32 %v1344, %v1345
        %v1347 = vrot.slane %v1346, 4
        %v1348 = vadd.f32 %v1346, %v1347
        %v1349 = vrot.slane %v1348, 2
        %v1350 = vadd.f32 %v1348, %v1349
        %v1351 = vrot.slane %v1350, 1
        %v1352 = vadd.f32 %v1350, %v1351
        %v1353 = vmul.f32 %v1289, 0.0625
        %v1354 = vmul.f32 %v1298, 0.0625
        %v1355 = vmul.f32 %v1307, 0.0625
        %v1356 = vmul.f32 %v1316, 0.0625
        %v1357 = vmul.f32 %v1325, 0.0625
        %v1358 = vmul.f32 %v1334, 0.0625
        %v1359 = vmul.f32 %v1343, 0.0625
        %v1360 = vmul.f32 %v1352, 0.0625
        %v1361 = vld [vmem:[%s5] sm:$0xff]
        %v1362 = vld [vmem:[%s5 + $0x8] sm:$0xff]
        %v1363 = vld [vmem:[%s5 + $0x10] sm:$0xff]
        %v1364 = vld [vmem:[%s5 + $0x18] sm:$0xff]
        %v1365 = vld [vmem:[%s5 + $0x20] sm:$0xff]
        %v1366 = vld [vmem:[%s5 + $0x28] sm:$0xff]
        %v1367 = vld [vmem:[%s5 + $0x30] sm:$0xff]
        %v1368 = vld [vmem:[%s5 + $0x38] sm:$0xff]
        %v1377 = vsel %vm754, %v1354, %v1353
        %v1378 = vsel %vm756, %v1355, %v1377
        %v1379 = vsel %vm758, %v1356, %v1378
        %v1380 = vsel %vm760, %v1357, %v1379
        %v1381 = vsel %vm762, %v1358, %v1380
        %v1382 = vsel %vm764, %v1359, %v1381
        %v1383 = vsel %vm766, %v1360, %v1382
        %v1384 = vsel %vm951, %v1383, 0
        %1386 = vmatpush.msra.mxu0 0.0
        %1387 = vmatpush.msra.mxu0 0.0
        %1388 = vmatpush.msra.mxu0 0.0
        %1389 = vmatpush.msra.mxu0 0.0
        %1390 = vmatpush.msra.mxu0 0.0
        %1391 = vmatpush.msra.mxu0 0.0
        %1392 = vmatpush.msra.mxu0 0.0
        %1393 = vmatpush.msra.mxu0 0.0
        %1394 = vmatpush.msra.mxu0 %v1368
        %1395 = vmatpush.msra.mxu0 %v1367
        %1396 = vmatpush.msra.mxu0 %v1366
        %1397 = vmatpush.msra.mxu0 %v1365
        %1398 = vmatpush.msra.mxu0 %v1364
        %1399 = vmatpush.msra.mxu0 %v1363
        %1400 = vmatpush.msra.mxu0 %v1362
        %1401 = vmatpush.msra.mxu0 %v1361
        %1402 = vmatmul.f32.gmra.mxu0 %v1384
        %v1403 = vpop.f32.mrf.mxu0
        %v1404 = vadd.f32 0.0, %v1403
        %1405 = vdwg.mxu0
        %v1406 = vld [vmem:[#allocation7] sm:$0xff]
        %v1407 = vld [vmem:[#allocation7 + $0x8] sm:$0xff]
        %v1408 = vld [vmem:[#allocation7 + $0x10] sm:$0xff]
        %v1409 = vld [vmem:[#allocation7 + $0x18] sm:$0xff]
        %v1411 = vsel %vm1081, %v1404, 0
        %1413 = vmatpush.msra.mxu0 0.0
        %1414 = vmatpush.msra.mxu0 0.0
        %1415 = vmatpush.msra.mxu0 0.0
        %1416 = vmatpush.msra.mxu0 0.0
        %1417 = vmatpush.msra.mxu0 0.0
        %1418 = vmatpush.msra.mxu0 0.0
        %1419 = vmatpush.msra.mxu0 0.0
        %1420 = vmatpush.msra.mxu0 0.0
        %1421 = vmatpush.msra.mxu0 0.0
        %1422 = vmatpush.msra.mxu0 0.0
        %1423 = vmatpush.msra.mxu0 0.0
        %1424 = vmatpush.msra.mxu0 0.0
        %1425 = vmatpush.msra.mxu0 %v1409
        %1426 = vmatpush.msra.mxu0 %v1408
        %1427 = vmatpush.msra.mxu0 %v1407
        %1428 = vmatpush.msra.mxu0 %v1406
        %1429 = vmatmul.f32.gmra.mxu0 %v1411
        %v1430 = vpop.f32.mrf.mxu0
        %v1431 = vadd.f32 0.0, %v1430
        %1432 = vdwg.mxu0
        %v1433 = vadd.f32 %v1126, %v1431
        %v1434 = vld [vmem:[%s9] sm:$0x1]
        %v1436 = vperm.slane %v1434, 0
        %v1438 = vadd.f32 %v1433, %v1436
        %v1439 = vmax.f32 %v1438, 0.0
        %v1440 = vld [vmem:[%s10] sm:$0xff]
        %v1441 = vld [vmem:[%s10 + $0x8] sm:$0xff]
        %v1442 = vld [vmem:[%s10 + $0x10] sm:$0xff]
        %v1443 = vld [vmem:[%s10 + $0x18] sm:$0xff]
        %v1444 = vld [vmem:[%s10 + $0x20] sm:$0xff]
        %v1445 = vld [vmem:[%s10 + $0x28] sm:$0xff]
        %v1446 = vld [vmem:[%s10 + $0x30] sm:$0xff]
        %v1447 = vld [vmem:[%s10 + $0x38] sm:$0xff]
        %v1448 = vld [vmem:[%s10 + $0x40] sm:$0xff]
        %v1449 = vld [vmem:[%s10 + $0x48] sm:$0xff]
        %v1450 = vld [vmem:[%s10 + $0x50] sm:$0xff]
        %v1451 = vld [vmem:[%s10 + $0x58] sm:$0xff]
        %v1452 = vld [vmem:[%s10 + $0x60] sm:$0xff]
        %v1453 = vld [vmem:[%s10 + $0x68] sm:$0xff]
        %v1454 = vld [vmem:[%s10 + $0x70] sm:$0xff]
        %v1455 = vld [vmem:[%s10 + $0x78] sm:$0xff]
        %v1456 = vld [vmem:[%s11] sm:$0x1]
        %v1458 = vperm.slane %v1456, 0
        %1460 = vmatpush.msra.mxu0 %v1455
        %1461 = vmatpush.msra.mxu0 %v1454
        %1462 = vmatpush.msra.mxu0 %v1453
        %1463 = vmatpush.msra.mxu0 %v1452
        %1464 = vmatpush.msra.mxu0 %v1451
        %1465 = vmatpush.msra.mxu0 %v1450
        %1466 = vmatpush.msra.mxu0 %v1449
        %1467 = vmatpush.msra.mxu0 %v1448
        %1468 = vmatpush.msra.mxu0 %v1447
        %1469 = vmatpush.msra.mxu0 %v1446
        %1470 = vmatpush.msra.mxu0 %v1445
        %1471 = vmatpush.msra.mxu0 %v1444
        %1472 = vmatpush.msra.mxu0 %v1443
        %1473 = vmatpush.msra.mxu0 %v1442
        %1474 = vmatpush.msra.mxu0 %v1441
        %1475 = vmatpush.msra.mxu0 %v1440
        %1476 = vmatmul.f32.gmra.mxu0 %v1439
        %v1477 = vpop.f32.mrf.mxu0
        %v1478 = vadd.f32 %v1458, %v1477
        %1479 = vdwg.mxu0
        %1480 = vst [vmem:[%s498] sm:$0xff] %v1478
        %s1481 = sand.u32 %s307, 1
        %s1482 = scalar_lea.sflag [#allocation4], %s1481
        %s1483 = sand.u32 %s307, 1
        %s1484 = smul.addr %s1483, 8
        %s1485 = scalar_lea.vmem [#allocation8], %s1484
        // Predicated region
        $region81: #{tpu_custom_call.1} parent=67 // pred_check
          %p1486 = pneg %p317
        $region82: #{tpu_custom_call.1} parent=67 // pred_check_branch
          %1488 = sbr.rel (%p1486) target = $region84
        $region83: #{tpu_custom_call.1} parent=67 // pred_region
          %1490 = vsyncadd %s1482, 0
          %s1491 = smul.addr %s32, 8
          %s1492 = scalar_lea.hbm %s12, %s1491
          %s1494 = sshll.u32 %s1485, 4
          %s1495 = int_to_ptr.vmem [resolvable:$true] %s1494
          %s1496 = sshll.u32 %s1492, 4
          %s1497 = int_to_ptr.hbm [resolvable:$true] %s1496
          %1499 = dma.vmem_to_hbm [thread:$0]  %s1495, 128, %s1497, %s1482
        $region84: #{tpu_custom_call.1} parent=67 // pred_fallthru
          _
      $region68: #{tpu_custom_call.1} parent=5 // pred_fallthru
        _
      %p1500 = scmp.le.s32.totalorder 2, %s27
      // Predicated region
      $region85: #{tpu_custom_call.1} parent=5 // pred_check
        %p1501 = pneg %p1500
      $region86: #{tpu_custom_call.1} parent=5 // pred_check_branch
        %1503 = sbr.rel (%p1501) target = $region88
      $region87: #{tpu_custom_call.1} parent=5 // pred_region
        %s1504 = ssub.s32 %s27, 2
        // Predicated region
        $region89: #{tpu_custom_call.1} parent=87 // pred_check
          %p1505 = pneg %p323
        $region90: #{tpu_custom_call.1} parent=87 // pred_check_branch
          %1507 = sbr.rel (%p1505) target = $region92
        $region91: #{tpu_custom_call.1} parent=87 // pred_region
          %s1508 = sand.u32 %s308, 1
          %s1509 = scalar_lea.sflag [#allocation4], %s1508
          %s1510 = sand.u32 %s308, 1
          %s1511 = smul.addr %s1510, 8
          %s1512 = scalar_lea.vmem [#allocation8], %s1511
          %1514 = dma.done %s1509, 128
        $region92: #{tpu_custom_call.1} parent=87 // pred_fallthru
          _
      $region88: #{tpu_custom_call.1} parent=5 // pred_fallthru
        _
    $region6: #{tpu_custom_call.1} parent=1 // loop_footer
      %s31 = sadd.s32 1, %s27
    $region7: #{tpu_custom_call.1} parent=1 // loop_footer_branch
      %26 = sbr.rel target = $region3
    $region8: #{tpu_custom_call.1} parent=1 // loop_exit
      _
    %1515 = vsyncpa [#allocation3], 1
    %s1516 = scalar_lea.sflag [#allocation3], 1
    %1517 = vsyncpa %s1516, 1
    %1518 = vsyncpa [#allocation6], 1
    %s1519 = scalar_lea.sflag [#allocation6], 1
    %1520 = vsyncpa %s1519, 1
    %1521 = vsyncpa [#allocation4], 1
    %s1522 = scalar_lea.sflag [#allocation4], 1
    %1523 = vsyncpa %s1522, 1

</llo_original>
